<compile_context>
chip_gen: v7x
topology: tpu7x:2x2x1
jax: 0.10.0
libtpu: 0.0.40
codegen_flags: <defaults>
</compile_context>

<pallas_src>
import jax
import jax.numpy as jnp
from jax.experimental import pallas as pl
from jax.experimental.pallas import tpu as pltpu

K_S, STRIDE, PAD = 2, 1, 1  # matches ActorConv.__init__


# ------------------------- fused conv+relu+fc+softmax -------------------------
def _make_fused_kernel(N, C, H, W, Hout, Wout, O):
    def kernel(x_ref, cw_ref, cb_ref, fw_ref, fb_ref,
               logits_ref, probs_ref, xpad_ref):
        # x_ref:    VMEM (N, 1, H, W)
        # cw_ref:   SMEM (C*K_S*K_S,)  conv weight, out-ch major then kh, kw
        # cb_ref:   SMEM (C,)          conv bias
        # fw_ref:   VMEM (O, C, Hout, Wout)  fc1.weight viewed row-major
        # fb_ref:   VMEM (1, O)        fc1.bias
        # logits_ref / probs_ref: VMEM (N, O)
        # xpad_ref: VMEM scratch (N, H+2, W+2)

        # Build the zero-padded input once, in VMEM (no wrapper-side jnp.pad).
        xpad_ref[...] = jnp.zeros_like(xpad_ref)
        xpad_ref[:, PAD:PAD + H, PAD:PAD + W] = x_ref[:, 0]

        # Hoist the 4 shifted windows (channel-independent): load once, reuse.
        win = [[xpad_ref[:, di:di + Hout, dj:dj + Wout] for dj in range(K_S)]
               for di in range(K_S)]

        # Accumulate logits channel-by-channel; the flattened activation never
        # materializes and nothing but (N, O) logits/probs is written to HBM.
        logits = jnp.zeros((N, O), jnp.float32) + fb_ref[...]
        for c in range(C):
            acc = jnp.full((N, Hout, Wout), cb_ref[c], jnp.float32)
            for di in range(K_S):
                for dj in range(K_S):
                    acc = acc + cw_ref[c * K_S * K_S + di * K_S + dj] * win[di][dj]
            act = jnp.maximum(acc, 0.0)                       # (N, Hout, Wout)
            wc = fw_ref[:, c]                                 # (O, Hout, Wout)
            prod = act[:, None, :, :] * wc[None, :, :, :]     # (N, O, Hout, Wout)
            logits = logits + prod.sum(axis=-1).sum(axis=-1)  # (N, O)

        logits_ref[...] = logits

        # F.softmax on a 2D tensor -> softmax over dim=1 (last dim).
        m = jnp.max(logits, axis=-1, keepdims=True)
        e = jnp.exp(logits - m)
        s = jnp.sum(e, axis=-1, keepdims=True)
        probs_ref[...] = e * pl.reciprocal(s, approx=False)   # EUP reciprocal

    return kernel


def actor_conv_forward(x, conv_w, conv_b, fc_w, fc_b):
    """x: (N, 1, H, W); conv_w: (C, 1, 2, 2); fc_w: (num_output, fc_in)."""
    N, _, H, W = x.shape
    C = conv_w.shape[0]
    num_output = fc_w.shape[0]
    Hout = (H - K_S + 2 * PAD) // STRIDE + 1
    Wout = (W - K_S + 2 * PAD) // STRIDE + 1

    # Free row-major views (no transposes, no layout blow-up).
    cw_flat = conv_w.reshape(-1).astype(jnp.float32)                 # (C*4,)
    fw4 = fc_w.reshape(num_output, C, Hout, Wout).astype(jnp.float32)
    fb_row = fc_b.reshape(1, num_output).astype(jnp.float32)

    return pl.pallas_call(
        _make_fused_kernel(N, C, H, W, Hout, Wout, num_output),
        out_shape=(
            jax.ShapeDtypeStruct((N, num_output), jnp.float32),
            jax.ShapeDtypeStruct((N, num_output), jnp.float32),
        ),
        in_specs=[
            pl.BlockSpec(memory_space=pltpu.MemorySpace.VMEM),   # x
            pl.BlockSpec(memory_space=pltpu.MemorySpace.SMEM),   # conv weight
            pl.BlockSpec(memory_space=pltpu.MemorySpace.SMEM),   # conv bias
            pl.BlockSpec(memory_space=pltpu.MemorySpace.VMEM),   # fc weight
            pl.BlockSpec(memory_space=pltpu.MemorySpace.VMEM),   # fc bias
        ],
        out_specs=(
            pl.BlockSpec(memory_space=pltpu.MemorySpace.VMEM),
            pl.BlockSpec(memory_space=pltpu.MemorySpace.VMEM),
        ),
        scratch_shapes=[
            pltpu.VMEM((N, H + 2 * PAD, W + 2 * PAD), jnp.float32),  # padded x
        ],
    )(x, cw_flat, conv_b, fw4, fb_row)


# ----------------------------------- main --------------------------------------
if __name__ == "__main__":
    N, C, H, W = 2, 4, 16, 16
    num_output = 8
    Hout, Wout = H + 1, W + 1
    fc_in = C * Hout * Wout  # 1156

    key = jax.random.PRNGKey(0)
    k1, k2, k3 = jax.random.split(key, 3)
    x = jax.random.normal(k1, (N, 1, H, W), jnp.float32)

    # deterministic init matching __init__: normal(std=0.01) weights, zero biases
    conv_w = 0.01 * jax.random.normal(k2, (C, 1, K_S, K_S), jnp.float32)
    conv_b = jnp.zeros((C,), jnp.float32)
    fc_w = 0.01 * jax.random.normal(k3, (num_output, fc_in), jnp.float32)
    fc_b = jnp.zeros((num_output,), jnp.float32)

    fwd = jax.jit(actor_conv_forward)
    logits, probs = fwd(x, conv_w, conv_b, fc_w, fc_b)
    jax.block_until_ready((logits, probs))

    # pure-JAX reference check
    ref_conv = jax.lax.conv_general_dilated(
        x, conv_w, window_strides=(STRIDE, STRIDE),
        padding=((PAD, PAD), (PAD, PAD)),
        dimension_numbers=("NCHW", "OIHW", "NCHW"),
    )
    ref_act = jnp.maximum(ref_conv + conv_b[None, :, None, None], 0.0).reshape(N, fc_in)
    ref_logits = ref_act @ fc_w.T + fc_b
    ref_probs = jax.nn.softmax(ref_logits, axis=1)

    assert logits.shape == (N, num_output) and probs.shape == (N, num_output)
    assert jnp.allclose(logits, ref_logits, atol=1e-5, rtol=1e-5)
    assert jnp.allclose(probs, ref_probs, atol=1e-6, rtol=1e-5)
    print("KERNEL_OK")
</pallas_src>

<mosaic_0001>
module attributes {stable_mosaic.version = 11 : i64} {
  func.func @kernel(%arg0: memref<2x1x16x16xf32, #tpu.memory_space<vmem>>, %arg1: memref<16xf32, #tpu.memory_space<smem>>, %arg2: memref<4xf32, #tpu.memory_space<smem>>, %arg3: memref<8x4x17x17xf32, #tpu.memory_space<vmem>>, %arg4: memref<1x8xf32, #tpu.memory_space<vmem>>, %arg5: memref<2x8xf32, #tpu.memory_space<vmem>>, %arg6: memref<2x8xf32, #tpu.memory_space<vmem>>, %arg7: memref<2x18x18xf32, #tpu.memory_space<vmem>>) attributes {dimension_semantics = [], scalar_prefetch = 0 : i64, scratch_operands = 1 : i64, tpu.core_type = #tpu.core_type<tc>} {
    %cst = arith.constant 0.000000e+00 : f32
    %0 = vector.broadcast %cst : f32 to vector<2x18x18xf32>
    %c0 = arith.constant 0 : index
    %c0_0 = arith.constant 0 : index
    %c0_1 = arith.constant 0 : index
    %1 = vector.load %arg7[%c0, %c0_0, %c0_1] : memref<2x18x18xf32, #tpu.memory_space<vmem>>, vector<2x18x18xf32>
    tpu.vector_store %arg7[%c0, %c0_0, %c0_1], %0 {strides = array<i32>} : memref<2x18x18xf32, #tpu.memory_space<vmem>>, vector<2x18x18xf32>,
    %c0_2 = arith.constant 0 : index
    %c0_3 = arith.constant 0 : index
    %c0_4 = arith.constant 0 : index
    %c0_5 = arith.constant 0 : index
    %2 = vector.load %arg0[%c0_2, %c0_3, %c0_4, %c0_5] : memref<2x1x16x16xf32, #tpu.memory_space<vmem>>, vector<2x1x16x16xf32>
    %3 = vector.shape_cast %2 : vector<2x1x16x16xf32> to vector<2x16x16xf32>
    %c0_6 = arith.constant 0 : index
    %c1 = arith.constant 1 : index
    %c1_7 = arith.constant 1 : index
    %4 = vector.load %arg7[%c0_6, %c1, %c1_7] : memref<2x18x18xf32, #tpu.memory_space<vmem>>, vector<2x16x16xf32>
    tpu.vector_store %arg7[%c0_6, %c1, %c1_7], %3 {strides = array<i32>} : memref<2x18x18xf32, #tpu.memory_space<vmem>>, vector<2x16x16xf32>,
    %c0_8 = arith.constant 0 : index
    %c0_9 = arith.constant 0 : index
    %c0_10 = arith.constant 0 : index
    %5 = vector.load %arg7[%c0_8, %c0_9, %c0_10] : memref<2x18x18xf32, #tpu.memory_space<vmem>>, vector<2x17x17xf32>
    %c0_11 = arith.constant 0 : index
    %c0_12 = arith.constant 0 : index
    %c1_13 = arith.constant 1 : index
    %6 = vector.load %arg7[%c0_11, %c0_12, %c1_13] : memref<2x18x18xf32, #tpu.memory_space<vmem>>, vector<2x17x17xf32>
    %c0_14 = arith.constant 0 : index
    %c1_15 = arith.constant 1 : index
    %c0_16 = arith.constant 0 : index
    %7 = vector.load %arg7[%c0_14, %c1_15, %c0_16] : memref<2x18x18xf32, #tpu.memory_space<vmem>>, vector<2x17x17xf32>
    %c0_17 = arith.constant 0 : index
    %c1_18 = arith.constant 1 : index
    %c1_19 = arith.constant 1 : index
    %8 = vector.load %arg7[%c0_17, %c1_18, %c1_19] : memref<2x18x18xf32, #tpu.memory_space<vmem>>, vector<2x17x17xf32>
    %cst_20 = arith.constant 0.000000e+00 : f32
    %9 = vector.broadcast %cst_20 : f32 to vector<2x8xf32>
    %c0_21 = arith.constant 0 : index
    %c0_22 = arith.constant 0 : index
    %10 = vector.load %arg4[%c0_21, %c0_22] : memref<1x8xf32, #tpu.memory_space<vmem>>, vector<1x8xf32>
    %11 = vector.broadcast %10 : vector<1x8xf32> to vector<2x8xf32>
    %12 = arith.addf %9, %11 : vector<2x8xf32>
    %c0_23 = arith.constant 0 : index
    %13 = memref.load %arg2[%c0_23] : memref<4xf32, #tpu.memory_space<smem>>
    %14 = vector.broadcast %13 : f32 to vector<2x17x17xf32>
    %c0_24 = arith.constant 0 : index
    %15 = memref.load %arg1[%c0_24] : memref<16xf32, #tpu.memory_space<smem>>
    %16 = vector.broadcast %15 : f32 to vector<2x17x17xf32>
    %17 = arith.mulf %16, %5 : vector<2x17x17xf32>
    %18 = arith.addf %14, %17 : vector<2x17x17xf32>
    %c1_25 = arith.constant 1 : index
    %19 = memref.load %arg1[%c1_25] : memref<16xf32, #tpu.memory_space<smem>>
    %20 = vector.broadcast %19 : f32 to vector<2x17x17xf32>
    %21 = arith.mulf %20, %6 : vector<2x17x17xf32>
    %22 = arith.addf %18, %21 : vector<2x17x17xf32>
    %c2 = arith.constant 2 : index
    %23 = memref.load %arg1[%c2] : memref<16xf32, #tpu.memory_space<smem>>
    %24 = vector.broadcast %23 : f32 to vector<2x17x17xf32>
    %25 = arith.mulf %24, %7 : vector<2x17x17xf32>
    %26 = arith.addf %22, %25 : vector<2x17x17xf32>
    %c3 = arith.constant 3 : index
    %27 = memref.load %arg1[%c3] : memref<16xf32, #tpu.memory_space<smem>>
    %28 = vector.broadcast %27 : f32 to vector<2x17x17xf32>
    %29 = arith.mulf %28, %8 : vector<2x17x17xf32>
    %30 = arith.addf %26, %29 : vector<2x17x17xf32>
    %cst_26 = arith.constant 0.000000e+00 : f32
    %31 = vector.broadcast %cst_26 : f32 to vector<2x17x17xf32>
    %32 = arith.maximumf %30, %31 : vector<2x17x17xf32>
    %c0_27 = arith.constant 0 : index
    %c0_28 = arith.constant 0 : index
    %c0_29 = arith.constant 0 : index
    %c0_30 = arith.constant 0 : index
    %33 = vector.load %arg3[%c0_27, %c0_28, %c0_29, %c0_30] : memref<8x4x17x17xf32, #tpu.memory_space<vmem>>, vector<8x1x17x17xf32>
    %34 = vector.shape_cast %33 : vector<8x1x17x17xf32> to vector<8x17x17xf32>
    %35 = vector.shape_cast %32 : vector<2x17x17xf32> to vector<2x1x17x17xf32>
    %36 = vector.shape_cast %34 : vector<8x17x17xf32> to vector<1x8x17x17xf32>
    %37 = vector.broadcast %35 : vector<2x1x17x17xf32> to vector<2x8x17x17xf32>
    %38 = vector.broadcast %36 : vector<1x8x17x17xf32> to vector<2x8x17x17xf32>
    %39 = arith.mulf %37, %38 : vector<2x8x17x17xf32>
    %cst_31 = arith.constant dense<0.000000e+00> : vector<2x8x17xf32>
    %40 = vector.multi_reduction <add>, %39, %cst_31 [3] : vector<2x8x17x17xf32> to vector<2x8x17xf32>
    %cst_32 = arith.constant dense<0.000000e+00> : vector<2x8xf32>
    %41 = vector.multi_reduction <add>, %40, %cst_32 [2] : vector<2x8x17xf32> to vector<2x8xf32>
    %42 = arith.addf %12, %41 : vector<2x8xf32>
    %c1_33 = arith.constant 1 : index
    %43 = memref.load %arg2[%c1_33] : memref<4xf32, #tpu.memory_space<smem>>
    %44 = vector.broadcast %43 : f32 to vector<2x17x17xf32>
    %c4 = arith.constant 4 : index
    %45 = memref.load %arg1[%c4] : memref<16xf32, #tpu.memory_space<smem>>
    %46 = vector.broadcast %45 : f32 to vector<2x17x17xf32>
    %47 = arith.mulf %46, %5 : vector<2x17x17xf32>
    %48 = arith.addf %44, %47 : vector<2x17x17xf32>
    %c5 = arith.constant 5 : index
    %49 = memref.load %arg1[%c5] : memref<16xf32, #tpu.memory_space<smem>>
    %50 = vector.broadcast %49 : f32 to vector<2x17x17xf32>
    %51 = arith.mulf %50, %6 : vector<2x17x17xf32>
    %52 = arith.addf %48, %51 : vector<2x17x17xf32>
    %c6 = arith.constant 6 : index
    %53 = memref.load %arg1[%c6] : memref<16xf32, #tpu.memory_space<smem>>
    %54 = vector.broadcast %53 : f32 to vector<2x17x17xf32>
    %55 = arith.mulf %54, %7 : vector<2x17x17xf32>
    %56 = arith.addf %52, %55 : vector<2x17x17xf32>
    %c7 = arith.constant 7 : index
    %57 = memref.load %arg1[%c7] : memref<16xf32, #tpu.memory_space<smem>>
    %58 = vector.broadcast %57 : f32 to vector<2x17x17xf32>
    %59 = arith.mulf %58, %8 : vector<2x17x17xf32>
    %60 = arith.addf %56, %59 : vector<2x17x17xf32>
    %cst_34 = arith.constant 0.000000e+00 : f32
    %61 = vector.broadcast %cst_34 : f32 to vector<2x17x17xf32>
    %62 = arith.maximumf %60, %61 : vector<2x17x17xf32>
    %c0_35 = arith.constant 0 : index
    %c1_36 = arith.constant 1 : index
    %c0_37 = arith.constant 0 : index
    %c0_38 = arith.constant 0 : index
    %63 = vector.load %arg3[%c0_35, %c1_36, %c0_37, %c0_38] : memref<8x4x17x17xf32, #tpu.memory_space<vmem>>, vector<8x1x17x17xf32>
    %64 = vector.shape_cast %63 : vector<8x1x17x17xf32> to vector<8x17x17xf32>
    %65 = vector.shape_cast %62 : vector<2x17x17xf32> to vector<2x1x17x17xf32>
    %66 = vector.shape_cast %64 : vector<8x17x17xf32> to vector<1x8x17x17xf32>
    %67 = vector.broadcast %65 : vector<2x1x17x17xf32> to vector<2x8x17x17xf32>
    %68 = vector.broadcast %66 : vector<1x8x17x17xf32> to vector<2x8x17x17xf32>
    %69 = arith.mulf %67, %68 : vector<2x8x17x17xf32>
    %cst_39 = arith.constant dense<0.000000e+00> : vector<2x8x17xf32>
    %70 = vector.multi_reduction <add>, %69, %cst_39 [3] : vector<2x8x17x17xf32> to vector<2x8x17xf32>
    %cst_40 = arith.constant dense<0.000000e+00> : vector<2x8xf32>
    %71 = vector.multi_reduction <add>, %70, %cst_40 [2] : vector<2x8x17xf32> to vector<2x8xf32>
    %72 = arith.addf %42, %71 : vector<2x8xf32>
    %c2_41 = arith.constant 2 : index
    %73 = memref.load %arg2[%c2_41] : memref<4xf32, #tpu.memory_space<smem>>
    %74 = vector.broadcast %73 : f32 to vector<2x17x17xf32>
    %c8 = arith.constant 8 : index
    %75 = memref.load %arg1[%c8] : memref<16xf32, #tpu.memory_space<smem>>
    %76 = vector.broadcast %75 : f32 to vector<2x17x17xf32>
    %77 = arith.mulf %76, %5 : vector<2x17x17xf32>
    %78 = arith.addf %74, %77 : vector<2x17x17xf32>
    %c9 = arith.constant 9 : index
    %79 = memref.load %arg1[%c9] : memref<16xf32, #tpu.memory_space<smem>>
    %80 = vector.broadcast %79 : f32 to vector<2x17x17xf32>
    %81 = arith.mulf %80, %6 : vector<2x17x17xf32>
    %82 = arith.addf %78, %81 : vector<2x17x17xf32>
    %c10 = arith.constant 10 : index
    %83 = memref.load %arg1[%c10] : memref<16xf32, #tpu.memory_space<smem>>
    %84 = vector.broadcast %83 : f32 to vector<2x17x17xf32>
    %85 = arith.mulf %84, %7 : vector<2x17x17xf32>
    %86 = arith.addf %82, %85 : vector<2x17x17xf32>
    %c11 = arith.constant 11 : index
    %87 = memref.load %arg1[%c11] : memref<16xf32, #tpu.memory_space<smem>>
    %88 = vector.broadcast %87 : f32 to vector<2x17x17xf32>
    %89 = arith.mulf %88, %8 : vector<2x17x17xf32>
    %90 = arith.addf %86, %89 : vector<2x17x17xf32>
    %cst_42 = arith.constant 0.000000e+00 : f32
    %91 = vector.broadcast %cst_42 : f32 to vector<2x17x17xf32>
    %92 = arith.maximumf %90, %91 : vector<2x17x17xf32>
    %c0_43 = arith.constant 0 : index
    %c2_44 = arith.constant 2 : index
    %c0_45 = arith.constant 0 : index
    %c0_46 = arith.constant 0 : index
    %93 = vector.load %arg3[%c0_43, %c2_44, %c0_45, %c0_46] : memref<8x4x17x17xf32, #tpu.memory_space<vmem>>, vector<8x1x17x17xf32>
    %94 = vector.shape_cast %93 : vector<8x1x17x17xf32> to vector<8x17x17xf32>
    %95 = vector.shape_cast %92 : vector<2x17x17xf32> to vector<2x1x17x17xf32>
    %96 = vector.shape_cast %94 : vector<8x17x17xf32> to vector<1x8x17x17xf32>
    %97 = vector.broadcast %95 : vector<2x1x17x17xf32> to vector<2x8x17x17xf32>
    %98 = vector.broadcast %96 : vector<1x8x17x17xf32> to vector<2x8x17x17xf32>
    %99 = arith.mulf %97, %98 : vector<2x8x17x17xf32>
    %cst_47 = arith.constant dense<0.000000e+00> : vector<2x8x17xf32>
    %100 = vector.multi_reduction <add>, %99, %cst_47 [3] : vector<2x8x17x17xf32> to vector<2x8x17xf32>
    %cst_48 = arith.constant dense<0.000000e+00> : vector<2x8xf32>
    %101 = vector.multi_reduction <add>, %100, %cst_48 [2] : vector<2x8x17xf32> to vector<2x8xf32>
    %102 = arith.addf %72, %101 : vector<2x8xf32>
    %c3_49 = arith.constant 3 : index
    %103 = memref.load %arg2[%c3_49] : memref<4xf32, #tpu.memory_space<smem>>
    %104 = vector.broadcast %103 : f32 to vector<2x17x17xf32>
    %c12 = arith.constant 12 : index
    %105 = memref.load %arg1[%c12] : memref<16xf32, #tpu.memory_space<smem>>
    %106 = vector.broadcast %105 : f32 to vector<2x17x17xf32>
    %107 = arith.mulf %106, %5 : vector<2x17x17xf32>
    %108 = arith.addf %104, %107 : vector<2x17x17xf32>
    %c13 = arith.constant 13 : index
    %109 = memref.load %arg1[%c13] : memref<16xf32, #tpu.memory_space<smem>>
    %110 = vector.broadcast %109 : f32 to vector<2x17x17xf32>
    %111 = arith.mulf %110, %6 : vector<2x17x17xf32>
    %112 = arith.addf %108, %111 : vector<2x17x17xf32>
    %c14 = arith.constant 14 : index
    %113 = memref.load %arg1[%c14] : memref<16xf32, #tpu.memory_space<smem>>
    %114 = vector.broadcast %113 : f32 to vector<2x17x17xf32>
    %115 = arith.mulf %114, %7 : vector<2x17x17xf32>
    %116 = arith.addf %112, %115 : vector<2x17x17xf32>
    %c15 = arith.constant 15 : index
    %117 = memref.load %arg1[%c15] : memref<16xf32, #tpu.memory_space<smem>>
    %118 = vector.broadcast %117 : f32 to vector<2x17x17xf32>
    %119 = arith.mulf %118, %8 : vector<2x17x17xf32>
    %120 = arith.addf %116, %119 : vector<2x17x17xf32>
    %cst_50 = arith.constant 0.000000e+00 : f32
    %121 = vector.broadcast %cst_50 : f32 to vector<2x17x17xf32>
    %122 = arith.maximumf %120, %121 : vector<2x17x17xf32>
    %c0_51 = arith.constant 0 : index
    %c3_52 = arith.constant 3 : index
    %c0_53 = arith.constant 0 : index
    %c0_54 = arith.constant 0 : index
    %123 = vector.load %arg3[%c0_51, %c3_52, %c0_53, %c0_54] : memref<8x4x17x17xf32, #tpu.memory_space<vmem>>, vector<8x1x17x17xf32>
    %124 = vector.shape_cast %123 : vector<8x1x17x17xf32> to vector<8x17x17xf32>
    %125 = vector.shape_cast %122 : vector<2x17x17xf32> to vector<2x1x17x17xf32>
    %126 = vector.shape_cast %124 : vector<8x17x17xf32> to vector<1x8x17x17xf32>
    %127 = vector.broadcast %125 : vector<2x1x17x17xf32> to vector<2x8x17x17xf32>
    %128 = vector.broadcast %126 : vector<1x8x17x17xf32> to vector<2x8x17x17xf32>
    %129 = arith.mulf %127, %128 : vector<2x8x17x17xf32>
    %cst_55 = arith.constant dense<0.000000e+00> : vector<2x8x17xf32>
    %130 = vector.multi_reduction <add>, %129, %cst_55 [3] : vector<2x8x17x17xf32> to vector<2x8x17xf32>
    %cst_56 = arith.constant dense<0.000000e+00> : vector<2x8xf32>
    %131 = vector.multi_reduction <add>, %130, %cst_56 [2] : vector<2x8x17xf32> to vector<2x8xf32>
    %132 = arith.addf %102, %131 : vector<2x8xf32>
    %c0_57 = arith.constant 0 : index
    %c0_58 = arith.constant 0 : index
    %133 = vector.load %arg5[%c0_57, %c0_58] : memref<2x8xf32, #tpu.memory_space<vmem>>, vector<2x8xf32>
    tpu.vector_store %arg5[%c0_57, %c0_58], %132 {strides = array<i32>} : memref<2x8xf32, #tpu.memory_space<vmem>>, vector<2x8xf32>,
    %cst_59 = arith.constant dense<0xFF800000> : vector<2xf32>
    %134 = vector.multi_reduction <maximumf>, %132, %cst_59 [1] : vector<2x8xf32> to vector<2xf32>
    %135 = vector.shape_cast %134 : vector<2xf32> to vector<2x1xf32>
    %136 = vector.broadcast %135 : vector<2x1xf32> to vector<2x8xf32>
    %137 = arith.subf %132, %136 : vector<2x8xf32>
    %138 = math.exp %137 : vector<2x8xf32>
    %cst_60 = arith.constant dense<0.000000e+00> : vector<2xf32>
    %139 = vector.multi_reduction <add>, %138, %cst_60 [1] : vector<2x8xf32> to vector<2xf32>
    %140 = vector.shape_cast %139 : vector<2xf32> to vector<2x1xf32>
    %141 = tpu.reciprocal %140 : vector<2x1xf32> -> vector<2x1xf32>
    %142 = vector.broadcast %141 : vector<2x1xf32> to vector<2x8xf32>
    %143 = arith.mulf %138, %142 : vector<2x8xf32>
    %c0_61 = arith.constant 0 : index
    %c0_62 = arith.constant 0 : index
    %144 = vector.load %arg6[%c0_61, %c0_62] : memref<2x8xf32, #tpu.memory_space<vmem>>, vector<2x8xf32>
    tpu.vector_store %arg6[%c0_61, %c0_62], %143 {strides = array<i32>} : memref<2x8xf32, #tpu.memory_space<vmem>>, vector<2x8xf32>,
    return
  }
}

</mosaic_0001>

<llo_original>
// kernel: actor_conv_forward.1
$region0: #{actor_conv_forward.1}
  #allocation0 [shape = 'u32[]', space=smem, size = 0x4, offset = 0x4, fixed_abs, tag = 'smem constant byte address 0x4 - core index']
  #allocation1 [shape = 'u32[144,128]{1,0:T(1,128)}', space=vmem, size = 0x12000, scoped, tag = 'internal scratch']
  #allocation2 [shape = 'f32[2,18,18]{2,1,0:T(8,128)}', space=vmem, size = 0x6000, scoped, tag = 'scratch operand']
  %s0 = inlined_call_operand.vmem [shape: f32[2,1,16,16], index: 0, kind: input, shape index: {}]
  %s1 = inlined_call_operand.vmem [shape: f32[16], index: 1, kind: input, shape index: {}]
  %s2 = inlined_call_operand.vmem [shape: f32[4], index: 2, kind: input, shape index: {}]
  %s3 = inlined_call_operand.vmem [shape: f32[8,4,17,17], index: 3, kind: input, shape index: {}]
  %s4 = inlined_call_operand.vmem [shape: f32[1,8], index: 4, kind: input, shape index: {}]
  %s5 = inlined_call_operand.hbm [shape: f32[2,8], index: 5, kind: output, shape index: {0}]
  %s6 = inlined_call_operand.hbm [shape: f32[2,8], index: 6, kind: output, shape index: {1}]
  %7 = xla_tuple %s5, %s6
  %s8 = sld [smem:[#allocation0]]
  $region46: #{actor_conv_forward.1} parent=0
    _
  %s10 = ssub.s32 1, %s8
  %s11 = scalar_select 0, %s10, %s8
  $region1: #{actor_conv_forward.1} parent=0
    #allocation3 [shape = 'u8[512]{0}', space=smem, size = 0x200, scoped, tag = 'input window, operand 1, single buffered']
    #allocation4 [shape = 's32[1]{0}', space=sflag, size = 0x4, scoped, tag = 'scoped memory for actor_conv_forward.1']
    #allocation5 [shape = 's32[1]{0}', space=sflag, size = 0x4, scoped, tag = 'scoped memory for actor_conv_forward.1']
    #allocation6 [shape = 'u8[512]{0}', space=smem, size = 0x200, scoped, tag = 'input window, operand 2, single buffered']
    #allocation7 [shape = 's32[1]{0}', space=sflag, size = 0x4, scoped, tag = 'scoped memory for actor_conv_forward.1']
    #allocation8 [shape = 'u8[1024]{0}', space=vmem, size = 0x400, scoped, tag = 'output window, operand 0, single buffered']
    #allocation9 [shape = 'u8[1024]{0}', space=vmem, size = 0x400, scoped, tag = 'output window, operand 1, single buffered']
    #allocation10 [shape = 's32[1]{0}', space=sflag, size = 0x4, scoped, tag = 'scoped memory for actor_conv_forward.1']
    %12 = vsyncpa [#allocation5], 0
    %13 = vsyncpa [#allocation7], 0
    %14 = vsyncpa [#allocation4], 0
    %15 = vsyncpa [#allocation10], 0
    // Predicated region
    $region2: #{actor_conv_forward.1} parent=1 // pred_check
      _
    $region3: #{actor_conv_forward.1} parent=1 // pred_check_branch
      %17 = sbr.rel (0) target = $region5
    $region4: #{actor_conv_forward.1} parent=1 // pred_region
      _
    $region5: #{actor_conv_forward.1} parent=1 // pred_fallthru
      _
    // Predicated region
    $region6: #{actor_conv_forward.1} parent=1 // pred_check
      _
    $region7: #{actor_conv_forward.1} parent=1 // pred_check_branch
      %19 = sbr.rel (0) target = $region9
    $region8: #{actor_conv_forward.1} parent=1 // pred_region
      %s21 = ssub.s32 16, 16
      %22 = vsyncadd [#allocation5], %s21
      %s24 = sshll.u32 %s1, 4
      %s25 = int_to_ptr.vmem [resolvable:$true] %s24
      %27 = dma.vmem_to_smem %s25, 16, [#allocation3], [#allocation5]
    $region9: #{actor_conv_forward.1} parent=1 // pred_fallthru
      _
    // Predicated region
    $region10: #{actor_conv_forward.1} parent=1 // pred_check
      _
    $region11: #{actor_conv_forward.1} parent=1 // pred_check_branch
      %29 = sbr.rel (0) target = $region13
    $region12: #{actor_conv_forward.1} parent=1 // pred_region
      %s31 = ssub.s32 16, 16
      %32 = vsyncadd [#allocation7], %s31
      %s34 = sshll.u32 %s2, 4
      %s35 = int_to_ptr.vmem [resolvable:$true] %s34
      %37 = dma.vmem_to_smem %s35, 16, [#allocation6], [#allocation7]
    $region13: #{actor_conv_forward.1} parent=1 // pred_fallthru
      _
    // Predicated region
    $region14: #{actor_conv_forward.1} parent=1 // pred_check
      _
    $region15: #{actor_conv_forward.1} parent=1 // pred_check_branch
      %39 = sbr.rel (0) target = $region17
    $region16: #{actor_conv_forward.1} parent=1 // pred_region
      _
    $region17: #{actor_conv_forward.1} parent=1 // pred_fallthru
      _
    // Predicated region
    $region18: #{actor_conv_forward.1} parent=1 // pred_check
      _
    $region19: #{actor_conv_forward.1} parent=1 // pred_check_branch
      %41 = sbr.rel (0) target = $region21
    $region20: #{actor_conv_forward.1} parent=1 // pred_region
      _
    $region21: #{actor_conv_forward.1} parent=1 // pred_fallthru
      _
    // Predicated region
    $region22: #{actor_conv_forward.1} parent=1 // pred_check
      _
    $region23: #{actor_conv_forward.1} parent=1 // pred_check_branch
      %43 = sbr.rel (0) target = $region25
    $region24: #{actor_conv_forward.1} parent=1 // pred_region
      %44 = dma.done [#allocation5], 16
    $region25: #{actor_conv_forward.1} parent=1 // pred_fallthru
      _
    // Predicated region
    $region26: #{actor_conv_forward.1} parent=1 // pred_check
      _
    $region27: #{actor_conv_forward.1} parent=1 // pred_check_branch
      %46 = sbr.rel (0) target = $region29
    $region28: #{actor_conv_forward.1} parent=1 // pred_region
      %47 = dma.done [#allocation7], 16
    $region29: #{actor_conv_forward.1} parent=1 // pred_fallthru
      _
    %48 = sfence
    %vm49 = vcmask 146432
    %50 = vst.msk [vmem:[#allocation2] sm:$0xff] %vm49, 0.0
    %51 = vst.msk [vmem:[#allocation2 + $0x8] sm:$0xff] %vm49, 0.0
    %vm52 = vcmask 140288
    %53 = vst.msk [vmem:[#allocation2 + $0x10] sm:$0x3] %vm52, 0.0
    %54 = vst.msk [vmem:[#allocation2 + $0x18] sm:$0xff] %vm49, 0.0
    %55 = vst.msk [vmem:[#allocation2 + $0x20] sm:$0xff] %vm49, 0.0
    %56 = vst.msk [vmem:[#allocation2 + $0x28] sm:$0x3] %vm52, 0.0
    %v57 = vld [vmem:[%s0] sm:$0xff]
    %v58 = vld [vmem:[%s0 + $0x8] sm:$0xff]
    %v59 = vld [vmem:[%s0 + $0x10] sm:$0xff]
    %v60 = vld [vmem:[%s0 + $0x18] sm:$0xff]
    %65 = vrot.lane.b32.xlu0 %v57, 1
    %v66 = vpop.permute.xlu0 %65
    %67 = vrot.lane.b32.xlu0 %v58, 1
    %v68 = vpop.permute.xlu0 %67
    %69 = vrot.lane.b32.xlu0 %v59, 1
    %v70 = vpop.permute.xlu0 %69
    %71 = vrot.lane.b32.xlu0 %v60, 1
    %v72 = vpop.permute.xlu0 %71
    %vm77 = vcmask 138248
    %78 = vst.msk [vmem:[#allocation2 + $0x1] sm:$0xff] %vm77, %v66
    %79 = vst.msk [vmem:[#allocation2 + $0x9] sm:$0xff] %vm77, %v68
    %80 = vst.msk [vmem:[#allocation2 + $0x19] sm:$0xff] %vm77, %v70
    %81 = vst.msk [vmem:[#allocation2 + $0x21] sm:$0xff] %vm77, %v72
    %v82 = vld [vmem:[#allocation2] sm:$0xff]
    %v83 = vld [vmem:[#allocation2 + $0x8] sm:$0xff]
    %v84 = vld [vmem:[#allocation2 + $0x10] sm:$0x1]
    %v85 = vld [vmem:[#allocation2 + $0x18] sm:$0xff]
    %v86 = vld [vmem:[#allocation2 + $0x20] sm:$0xff]
    %v87 = vld [vmem:[#allocation2 + $0x28] sm:$0x1]
    %v88 = vld [vmem:[#allocation2 + $0x1] sm:$0xff]
    %v89 = vld [vmem:[#allocation2 + $0x9] sm:$0xff]
    %v90 = vld [vmem:[#allocation2 + $0x11] sm:$0x1]
    %v91 = vld [vmem:[#allocation2 + $0x19] sm:$0xff]
    %v92 = vld [vmem:[#allocation2 + $0x21] sm:$0xff]
    %v93 = vld [vmem:[#allocation2 + $0x29] sm:$0x1]
    %v94 = vld [vmem:[%s4] sm:$0x1]
    %v96 = vlaneseq
    %v97 = vshrl.u32 %v96, 7
    %v98 = vsub.s32 0, %v97
    %v99 = vrot.slane %v94, %v98
    %v101 = vadd.f32 %v99, 0.0
    %s102 = sld [smem:[#allocation6]]
    %v103 = vstv %s102
    %s104 = sld [smem:[#allocation3]]
    %v105 = vstv %s104
    %v106 = vmul.f32 %v105, %v82
    %v107 = vmul.f32 %v105, %v83
    %v108 = vmul.f32 %v105, %v84
    %v109 = vmul.f32 %v105, %v85
    %v110 = vmul.f32 %v105, %v86
    %v111 = vmul.f32 %v105, %v87
    %v112 = vadd.f32 %v103, %v106
    %v113 = vadd.f32 %v103, %v107
    %v114 = vadd.f32 %v103, %v108
    %v115 = vadd.f32 %v103, %v109
    %v116 = vadd.f32 %v103, %v110
    %v117 = vadd.f32 %v103, %v111
    %s118 = sld [smem:[#allocation3 + $0x1]]
    %v119 = vstv %s118
    %v120 = vmul.f32 %v119, %v82
    %v121 = vmul.f32 %v119, %v83
    %v122 = vmul.f32 %v119, %v84
    %v123 = vmul.f32 %v119, %v85
    %v124 = vmul.f32 %v119, %v86
    %v125 = vmul.f32 %v119, %v87
    %132 = vrot.lane.b32.xlu0 %v120, 127
    %v133 = vpop.permute.xlu0 %132
    %134 = vrot.lane.b32.xlu0 %v121, 127
    %v135 = vpop.permute.xlu0 %134
    %136 = vrot.lane.b32.xlu0 %v122, 127
    %v137 = vpop.permute.xlu0 %136
    %138 = vrot.lane.b32.xlu0 %v123, 127
    %v139 = vpop.permute.xlu0 %138
    %140 = vrot.lane.b32.xlu0 %v124, 127
    %v141 = vpop.permute.xlu0 %140
    %142 = vrot.lane.b32.xlu0 %v125, 127
    %v143 = vpop.permute.xlu0 %142
    %v150 = vadd.f32 %v112, %v133
    %v151 = vadd.f32 %v113, %v135
    %v152 = vadd.f32 %v114, %v137
    %v153 = vadd.f32 %v115, %v139
    %v154 = vadd.f32 %v116, %v141
    %v155 = vadd.f32 %v117, %v143
    %s156 = sld [smem:[#allocation3 + $0x2]]
    %v157 = vstv %s156
    %v158 = vmul.f32 %v157, %v88
    %v159 = vmul.f32 %v157, %v89
    %v160 = vmul.f32 %v157, %v90
    %v161 = vmul.f32 %v157, %v91
    %v162 = vmul.f32 %v157, %v92
    %v163 = vmul.f32 %v157, %v93
    %v164 = vadd.f32 %v150, %v158
    %v165 = vadd.f32 %v151, %v159
    %v166 = vadd.f32 %v152, %v160
    %v167 = vadd.f32 %v153, %v161
    %v168 = vadd.f32 %v154, %v162
    %v169 = vadd.f32 %v155, %v163
    %s170 = sld [smem:[#allocation3 + $0x3]]
    %v171 = vstv %s170
    %v172 = vmul.f32 %v171, %v88
    %v173 = vmul.f32 %v171, %v89
    %v174 = vmul.f32 %v171, %v90
    %v175 = vmul.f32 %v171, %v91
    %v176 = vmul.f32 %v171, %v92
    %v177 = vmul.f32 %v171, %v93
    %184 = vrot.lane.b32.xlu0 %v172, 127
    %v185 = vpop.permute.xlu0 %184
    %186 = vrot.lane.b32.xlu0 %v173, 127
    %v187 = vpop.permute.xlu0 %186
    %188 = vrot.lane.b32.xlu0 %v174, 127
    %v189 = vpop.permute.xlu0 %188
    %190 = vrot.lane.b32.xlu0 %v175, 127
    %v191 = vpop.permute.xlu0 %190
    %192 = vrot.lane.b32.xlu0 %v176, 127
    %v193 = vpop.permute.xlu0 %192
    %194 = vrot.lane.b32.xlu0 %v177, 127
    %v195 = vpop.permute.xlu0 %194
    %v202 = vadd.f32 %v164, %v185
    %v203 = vadd.f32 %v165, %v187
    %v204 = vadd.f32 %v166, %v189
    %v205 = vadd.f32 %v167, %v191
    %v206 = vadd.f32 %v168, %v193
    %v207 = vadd.f32 %v169, %v195
    %v208 = vmax.f32 %v202, 0.0
    %v209 = vmax.f32 %v203, 0.0
    %v210 = vmax.f32 %v204, 0.0
    %v211 = vmax.f32 %v205, 0.0
    %v212 = vmax.f32 %v206, 0.0
    %v213 = vmax.f32 %v207, 0.0
    %v214 = vld [vmem:[%s3] sm:$0xff]
    %v215 = vld [vmem:[%s3 + $0x8] sm:$0xff]
    %v216 = vld [vmem:[%s3 + $0x10] sm:$0x1]
    %v217 = vld [vmem:[%s3 + $0x60] sm:$0xff]
    %v218 = vld [vmem:[%s3 + $0x68] sm:$0xff]
    %v219 = vld [vmem:[%s3 + $0x70] sm:$0x1]
    %v220 = vld [vmem:[%s3 + $0xc0] sm:$0xff]
    %v221 = vld [vmem:[%s3 + $0xc8] sm:$0xff]
    %v222 = vld [vmem:[%s3 + $0xd0] sm:$0x1]
    %v223 = vld [vmem:[%s3 + $0x120] sm:$0xff]
    %v224 = vld [vmem:[%s3 + $0x128] sm:$0xff]
    %v225 = vld [vmem:[%s3 + $0x130] sm:$0x1]
    %v226 = vld [vmem:[%s3 + $0x180] sm:$0xff]
    %v227 = vld [vmem:[%s3 + $0x188] sm:$0xff]
    %v228 = vld [vmem:[%s3 + $0x190] sm:$0x1]
    %v229 = vld [vmem:[%s3 + $0x1e0] sm:$0xff]
    %v230 = vld [vmem:[%s3 + $0x1e8] sm:$0xff]
    %v231 = vld [vmem:[%s3 + $0x1f0] sm:$0x1]
    %v232 = vld [vmem:[%s3 + $0x240] sm:$0xff]
    %v233 = vld [vmem:[%s3 + $0x248] sm:$0xff]
    %v234 = vld [vmem:[%s3 + $0x250] sm:$0x1]
    %v235 = vld [vmem:[%s3 + $0x2a0] sm:$0xff]
    %v236 = vld [vmem:[%s3 + $0x2a8] sm:$0xff]
    %v237 = vld [vmem:[%s3 + $0x2b0] sm:$0x1]
    %v238 = vmul.f32 %v208, %v214
    %v239 = vmul.f32 %v209, %v215
    %v240 = vmul.f32 %v210, %v216
    %v241 = vmul.f32 %v208, %v217
    %v242 = vmul.f32 %v209, %v218
    %v243 = vmul.f32 %v210, %v219
    %v244 = vmul.f32 %v208, %v220
    %v245 = vmul.f32 %v209, %v221
    %v246 = vmul.f32 %v210, %v222
    %v247 = vmul.f32 %v208, %v223
    %v248 = vmul.f32 %v209, %v224
    %v249 = vmul.f32 %v210, %v225
    %v250 = vmul.f32 %v208, %v226
    %v251 = vmul.f32 %v209, %v227
    %v252 = vmul.f32 %v210, %v228
    %v253 = vmul.f32 %v208, %v229
    %v254 = vmul.f32 %v209, %v230
    %v255 = vmul.f32 %v210, %v231
    %v256 = vmul.f32 %v208, %v232
    %v257 = vmul.f32 %v209, %v233
    %v258 = vmul.f32 %v210, %v234
    %v259 = vmul.f32 %v208, %v235
    %v260 = vmul.f32 %v209, %v236
    %v261 = vmul.f32 %v210, %v237
    %v262 = vmul.f32 %v211, %v214
    %v263 = vmul.f32 %v212, %v215
    %v264 = vmul.f32 %v213, %v216
    %v265 = vmul.f32 %v211, %v217
    %v266 = vmul.f32 %v212, %v218
    %v267 = vmul.f32 %v213, %v219
    %v268 = vmul.f32 %v211, %v220
    %v269 = vmul.f32 %v212, %v221
    %v270 = vmul.f32 %v213, %v222
    %v271 = vmul.f32 %v211, %v223
    %v272 = vmul.f32 %v212, %v224
    %v273 = vmul.f32 %v213, %v225
    %v274 = vmul.f32 %v211, %v226
    %v275 = vmul.f32 %v212, %v227
    %v276 = vmul.f32 %v213, %v228
    %v277 = vmul.f32 %v211, %v229
    %v278 = vmul.f32 %v212, %v230
    %v279 = vmul.f32 %v213, %v231
    %v280 = vmul.f32 %v211, %v232
    %v281 = vmul.f32 %v212, %v233
    %v282 = vmul.f32 %v213, %v234
    %v283 = vmul.f32 %v211, %v235
    %v284 = vmul.f32 %v212, %v236
    %v285 = vmul.f32 %v213, %v237
    %vm286 = vcmask 138240
    %v287 = vsel %vm286, %v238, 0.0
    %288 = vadd.xlane.f32.xlu0 %v287
    %v289 = vpop.xlane.xlu0 %288
    %v290 = vsel %vm286, %v239, 0.0
    %291 = vadd.xlane.f32.xlu0 %v290
    %v292 = vpop.xlane.xlu0 %291
    %vm293 = vcmask 131072
    %v294 = vsel %vm293, %v240, 0.0
    %295 = vadd.xlane.f32.xlu0 %v294
    %v296 = vpop.xlane.xlu0 %295
    %v297 = vsel %vm286, %v241, 0.0
    %298 = vadd.xlane.f32.xlu0 %v297
    %v299 = vpop.xlane.xlu0 %298
    %v300 = vsel %vm286, %v242, 0.0
    %301 = vadd.xlane.f32.xlu0 %v300
    %v302 = vpop.xlane.xlu0 %301
    %v303 = vsel %vm293, %v243, 0.0
    %304 = vadd.xlane.f32.xlu0 %v303
    %v305 = vpop.xlane.xlu0 %304
    %v306 = vsel %vm286, %v244, 0.0
    %307 = vadd.xlane.f32.xlu0 %v306
    %v308 = vpop.xlane.xlu0 %307
    %v309 = vsel %vm286, %v245, 0.0
    %310 = vadd.xlane.f32.xlu0 %v309
    %v311 = vpop.xlane.xlu0 %310
    %v312 = vsel %vm293, %v246, 0.0
    %313 = vadd.xlane.f32.xlu0 %v312
    %v314 = vpop.xlane.xlu0 %313
    %v315 = vsel %vm286, %v247, 0.0
    %316 = vadd.xlane.f32.xlu0 %v315
    %v317 = vpop.xlane.xlu0 %316
    %v318 = vsel %vm286, %v248, 0.0
    %319 = vadd.xlane.f32.xlu0 %v318
    %v320 = vpop.xlane.xlu0 %319
    %v321 = vsel %vm293, %v249, 0.0
    %322 = vadd.xlane.f32.xlu0 %v321
    %v323 = vpop.xlane.xlu0 %322
    %v324 = vsel %vm286, %v250, 0.0
    %325 = vadd.xlane.f32.xlu0 %v324
    %v326 = vpop.xlane.xlu0 %325
    %v327 = vsel %vm286, %v251, 0.0
    %328 = vadd.xlane.f32.xlu0 %v327
    %v329 = vpop.xlane.xlu0 %328
    %v330 = vsel %vm293, %v252, 0.0
    %331 = vadd.xlane.f32.xlu0 %v330
    %v332 = vpop.xlane.xlu0 %331
    %v333 = vsel %vm286, %v253, 0.0
    %334 = vadd.xlane.f32.xlu0 %v333
    %v335 = vpop.xlane.xlu0 %334
    %v336 = vsel %vm286, %v254, 0.0
    %337 = vadd.xlane.f32.xlu0 %v336
    %v338 = vpop.xlane.xlu0 %337
    %v339 = vsel %vm293, %v255, 0.0
    %340 = vadd.xlane.f32.xlu0 %v339
    %v341 = vpop.xlane.xlu0 %340
    %v342 = vsel %vm286, %v256, 0.0
    %343 = vadd.xlane.f32.xlu0 %v342
    %v344 = vpop.xlane.xlu0 %343
    %v345 = vsel %vm286, %v257, 0.0
    %346 = vadd.xlane.f32.xlu0 %v345
    %v347 = vpop.xlane.xlu0 %346
    %v348 = vsel %vm293, %v258, 0.0
    %349 = vadd.xlane.f32.xlu0 %v348
    %v350 = vpop.xlane.xlu0 %349
    %v351 = vsel %vm286, %v259, 0.0
    %352 = vadd.xlane.f32.xlu0 %v351
    %v353 = vpop.xlane.xlu0 %352
    %v354 = vsel %vm286, %v260, 0.0
    %355 = vadd.xlane.f32.xlu0 %v354
    %v356 = vpop.xlane.xlu0 %355
    %v357 = vsel %vm293, %v261, 0.0
    %358 = vadd.xlane.f32.xlu0 %v357
    %v359 = vpop.xlane.xlu0 %358
    %v360 = vsel %vm286, %v262, 0.0
    %361 = vadd.xlane.f32.xlu0 %v360
    %v362 = vpop.xlane.xlu0 %361
    %v363 = vsel %vm286, %v263, 0.0
    %364 = vadd.xlane.f32.xlu0 %v363
    %v365 = vpop.xlane.xlu0 %364
    %v366 = vsel %vm293, %v264, 0.0
    %367 = vadd.xlane.f32.xlu0 %v366
    %v368 = vpop.xlane.xlu0 %367
    %v369 = vsel %vm286, %v265, 0.0
    %370 = vadd.xlane.f32.xlu0 %v369
    %v371 = vpop.xlane.xlu0 %370
    %v372 = vsel %vm286, %v266, 0.0
    %373 = vadd.xlane.f32.xlu0 %v372
    %v374 = vpop.xlane.xlu0 %373
    %v375 = vsel %vm293, %v267, 0.0
    %376 = vadd.xlane.f32.xlu0 %v375
    %v377 = vpop.xlane.xlu0 %376
    %v378 = vsel %vm286, %v268, 0.0
    %379 = vadd.xlane.f32.xlu0 %v378
    %v380 = vpop.xlane.xlu0 %379
    %v381 = vsel %vm286, %v269, 0.0
    %382 = vadd.xlane.f32.xlu0 %v381
    %v383 = vpop.xlane.xlu0 %382
    %v384 = vsel %vm293, %v270, 0.0
    %385 = vadd.xlane.f32.xlu0 %v384
    %v386 = vpop.xlane.xlu0 %385
    %v387 = vsel %vm286, %v271, 0.0
    %388 = vadd.xlane.f32.xlu0 %v387
    %v389 = vpop.xlane.xlu0 %388
    %v390 = vsel %vm286, %v272, 0.0
    %391 = vadd.xlane.f32.xlu0 %v390
    %v392 = vpop.xlane.xlu0 %391
    %v393 = vsel %vm293, %v273, 0.0
    %394 = vadd.xlane.f32.xlu0 %v393
    %v395 = vpop.xlane.xlu0 %394
    %v396 = vsel %vm286, %v274, 0.0
    %397 = vadd.xlane.f32.xlu0 %v396
    %v398 = vpop.xlane.xlu0 %397
    %v399 = vsel %vm286, %v275, 0.0
    %400 = vadd.xlane.f32.xlu0 %v399
    %v401 = vpop.xlane.xlu0 %400
    %v402 = vsel %vm293, %v276, 0.0
    %403 = vadd.xlane.f32.xlu0 %v402
    %v404 = vpop.xlane.xlu0 %403
    %v405 = vsel %vm286, %v277, 0.0
    %406 = vadd.xlane.f32.xlu0 %v405
    %v407 = vpop.xlane.xlu0 %406
    %v408 = vsel %vm286, %v278, 0.0
    %409 = vadd.xlane.f32.xlu0 %v408
    %v410 = vpop.xlane.xlu0 %409
    %v411 = vsel %vm293, %v279, 0.0
    %412 = vadd.xlane.f32.xlu0 %v411
    %v413 = vpop.xlane.xlu0 %412
    %v414 = vsel %vm286, %v280, 0.0
    %415 = vadd.xlane.f32.xlu0 %v414
    %v416 = vpop.xlane.xlu0 %415
    %v417 = vsel %vm286, %v281, 0.0
    %418 = vadd.xlane.f32.xlu0 %v417
    %v419 = vpop.xlane.xlu0 %418
    %v420 = vsel %vm293, %v282, 0.0
    %421 = vadd.xlane.f32.xlu0 %v420
    %v422 = vpop.xlane.xlu0 %421
    %v423 = vsel %vm286, %v283, 0.0
    %424 = vadd.xlane.f32.xlu0 %v423
    %v425 = vpop.xlane.xlu0 %424
    %v426 = vsel %vm286, %v284, 0.0
    %427 = vadd.xlane.f32.xlu0 %v426
    %v428 = vpop.xlane.xlu0 %427
    %v429 = vsel %vm293, %v285, 0.0
    %430 = vadd.xlane.f32.xlu0 %v429
    %v431 = vpop.xlane.xlu0 %430
    %v480 = vlaneseq
    %v481 = vand.u32 %v480, 127
    %v482 = vlaneseq
    %v483 = vshrl.u32 %v482, 7
    %v484 = vsub.s32 %v481, %v483
    %v485 = vrot.slane %v289, %v484
    %v486 = vadd.s32 %v481, 4294967288
    %v487 = vlaneseq
    %v488 = vshrl.u32 %v487, 7
    %v489 = vsub.s32 %v486, %v488
    %v490 = vrot.slane %v292, %v489
    %vm491 = vcmask 130112
    %v492 = vsel %vm491, %v490, %v485
    %v493 = vadd.s32 %v481, 4294967280
    %v494 = vlaneseq
    %v495 = vshrl.u32 %v494, 7
    %v496 = vsub.s32 %v493, %v495
    %v497 = vrot.slane %v296, %v496
    %vm498 = vcmask 195712
    %v499 = vsel %vm498, %v497, %v492
    %v500 = vlaneseq
    %v501 = vshrl.u32 %v500, 7
    %v502 = vsub.s32 %v481, %v501
    %v503 = vrot.slane %v299, %v502
    %v504 = vlaneseq
    %v505 = vshrl.u32 %v504, 7
    %v506 = vsub.s32 %v486, %v505
    %v507 = vrot.slane %v302, %v506
    %v508 = vsel %vm491, %v507, %v503
    %v509 = vlaneseq
    %v510 = vshrl.u32 %v509, 7
    %v511 = vsub.s32 %v493, %v510
    %v512 = vrot.slane %v305, %v511
    %v513 = vsel %vm498, %v512, %v508
    %v514 = vlaneseq
    %v515 = vshrl.u32 %v514, 7
    %v516 = vsub.s32 %v481, %v515
    %v517 = vrot.slane %v308, %v516
    %v518 = vlaneseq
    %v519 = vshrl.u32 %v518, 7
    %v520 = vsub.s32 %v486, %v519
    %v521 = vrot.slane %v311, %v520
    %v522 = vsel %vm491, %v521, %v517
    %v523 = vlaneseq
    %v524 = vshrl.u32 %v523, 7
    %v525 = vsub.s32 %v493, %v524
    %v526 = vrot.slane %v314, %v525
    %v527 = vsel %vm498, %v526, %v522
    %v528 = vlaneseq
    %v529 = vshrl.u32 %v528, 7
    %v530 = vsub.s32 %v481, %v529
    %v531 = vrot.slane %v317, %v530
    %v532 = vlaneseq
    %v533 = vshrl.u32 %v532, 7
    %v534 = vsub.s32 %v486, %v533
    %v535 = vrot.slane %v320, %v534
    %v536 = vsel %vm491, %v535, %v531
    %v537 = vlaneseq
    %v538 = vshrl.u32 %v537, 7
    %v539 = vsub.s32 %v493, %v538
    %v540 = vrot.slane %v323, %v539
    %v541 = vsel %vm498, %v540, %v536
    %v542 = vlaneseq
    %v543 = vshrl.u32 %v542, 7
    %v544 = vsub.s32 %v481, %v543
    %v545 = vrot.slane %v326, %v544
    %v546 = vlaneseq
    %v547 = vshrl.u32 %v546, 7
    %v548 = vsub.s32 %v486, %v547
    %v549 = vrot.slane %v329, %v548
    %v550 = vsel %vm491, %v549, %v545
    %v551 = vlaneseq
    %v552 = vshrl.u32 %v551, 7
    %v553 = vsub.s32 %v493, %v552
    %v554 = vrot.slane %v332, %v553
    %v555 = vsel %vm498, %v554, %v550
    %v556 = vlaneseq
    %v557 = vshrl.u32 %v556, 7
    %v558 = vsub.s32 %v481, %v557
    %v559 = vrot.slane %v335, %v558
    %v560 = vlaneseq
    %v561 = vshrl.u32 %v560, 7
    %v562 = vsub.s32 %v486, %v561
    %v563 = vrot.slane %v338, %v562
    %v564 = vsel %vm491, %v563, %v559
    %v565 = vlaneseq
    %v566 = vshrl.u32 %v565, 7
    %v567 = vsub.s32 %v493, %v566
    %v568 = vrot.slane %v341, %v567
    %v569 = vsel %vm498, %v568, %v564
    %v570 = vlaneseq
    %v571 = vshrl.u32 %v570, 7
    %v572 = vsub.s32 %v481, %v571
    %v573 = vrot.slane %v344, %v572
    %v574 = vlaneseq
    %v575 = vshrl.u32 %v574, 7
    %v576 = vsub.s32 %v486, %v575
    %v577 = vrot.slane %v347, %v576
    %v578 = vsel %vm491, %v577, %v573
    %v579 = vlaneseq
    %v580 = vshrl.u32 %v579, 7
    %v581 = vsub.s32 %v493, %v580
    %v582 = vrot.slane %v350, %v581
    %v583 = vsel %vm498, %v582, %v578
    %v584 = vlaneseq
    %v585 = vshrl.u32 %v584, 7
    %v586 = vsub.s32 %v481, %v585
    %v587 = vrot.slane %v353, %v586
    %v588 = vlaneseq
    %v589 = vshrl.u32 %v588, 7
    %v590 = vsub.s32 %v486, %v589
    %v591 = vrot.slane %v356, %v590
    %v592 = vsel %vm491, %v591, %v587
    %v593 = vlaneseq
    %v594 = vshrl.u32 %v593, 7
    %v595 = vsub.s32 %v493, %v594
    %v596 = vrot.slane %v359, %v595
    %v597 = vsel %vm498, %v596, %v592
    %v598 = vlaneseq
    %v599 = vshrl.u32 %v598, 7
    %v600 = vsub.s32 %v481, %v599
    %v601 = vrot.slane %v362, %v600
    %v602 = vlaneseq
    %v603 = vshrl.u32 %v602, 7
    %v604 = vsub.s32 %v486, %v603
    %v605 = vrot.slane %v365, %v604
    %v606 = vsel %vm491, %v605, %v601
    %v607 = vlaneseq
    %v608 = vshrl.u32 %v607, 7
    %v609 = vsub.s32 %v493, %v608
    %v610 = vrot.slane %v368, %v609
    %v611 = vsel %vm498, %v610, %v606
    %v612 = vlaneseq
    %v613 = vshrl.u32 %v612, 7
    %v614 = vsub.s32 %v481, %v613
    %v615 = vrot.slane %v371, %v614
    %v616 = vlaneseq
    %v617 = vshrl.u32 %v616, 7
    %v618 = vsub.s32 %v486, %v617
    %v619 = vrot.slane %v374, %v618
    %v620 = vsel %vm491, %v619, %v615
    %v621 = vlaneseq
    %v622 = vshrl.u32 %v621, 7
    %v623 = vsub.s32 %v493, %v622
    %v624 = vrot.slane %v377, %v623
    %v625 = vsel %vm498, %v624, %v620
    %v626 = vlaneseq
    %v627 = vshrl.u32 %v626, 7
    %v628 = vsub.s32 %v481, %v627
    %v629 = vrot.slane %v380, %v628
    %v630 = vlaneseq
    %v631 = vshrl.u32 %v630, 7
    %v632 = vsub.s32 %v486, %v631
    %v633 = vrot.slane %v383, %v632
    %v634 = vsel %vm491, %v633, %v629
    %v635 = vlaneseq
    %v636 = vshrl.u32 %v635, 7
    %v637 = vsub.s32 %v493, %v636
    %v638 = vrot.slane %v386, %v637
    %v639 = vsel %vm498, %v638, %v634
    %v640 = vlaneseq
    %v641 = vshrl.u32 %v640, 7
    %v642 = vsub.s32 %v481, %v641
    %v643 = vrot.slane %v389, %v642
    %v644 = vlaneseq
    %v645 = vshrl.u32 %v644, 7
    %v646 = vsub.s32 %v486, %v645
    %v647 = vrot.slane %v392, %v646
    %v648 = vsel %vm491, %v647, %v643
    %v649 = vlaneseq
    %v650 = vshrl.u32 %v649, 7
    %v651 = vsub.s32 %v493, %v650
    %v652 = vrot.slane %v395, %v651
    %v653 = vsel %vm498, %v652, %v648
    %v654 = vlaneseq
    %v655 = vshrl.u32 %v654, 7
    %v656 = vsub.s32 %v481, %v655
    %v657 = vrot.slane %v398, %v656
    %v658 = vlaneseq
    %v659 = vshrl.u32 %v658, 7
    %v660 = vsub.s32 %v486, %v659
    %v661 = vrot.slane %v401, %v660
    %v662 = vsel %vm491, %v661, %v657
    %v663 = vlaneseq
    %v664 = vshrl.u32 %v663, 7
    %v665 = vsub.s32 %v493, %v664
    %v666 = vrot.slane %v404, %v665
    %v667 = vsel %vm498, %v666, %v662
    %v668 = vlaneseq
    %v669 = vshrl.u32 %v668, 7
    %v670 = vsub.s32 %v481, %v669
    %v671 = vrot.slane %v407, %v670
    %v672 = vlaneseq
    %v673 = vshrl.u32 %v672, 7
    %v674 = vsub.s32 %v486, %v673
    %v675 = vrot.slane %v410, %v674
    %v676 = vsel %vm491, %v675, %v671
    %v677 = vlaneseq
    %v678 = vshrl.u32 %v677, 7
    %v679 = vsub.s32 %v493, %v678
    %v680 = vrot.slane %v413, %v679
    %v681 = vsel %vm498, %v680, %v676
    %v682 = vlaneseq
    %v683 = vshrl.u32 %v682, 7
    %v684 = vsub.s32 %v481, %v683
    %v685 = vrot.slane %v416, %v684
    %v686 = vlaneseq
    %v687 = vshrl.u32 %v686, 7
    %v688 = vsub.s32 %v486, %v687
    %v689 = vrot.slane %v419, %v688
    %v690 = vsel %vm491, %v689, %v685
    %v691 = vlaneseq
    %v692 = vshrl.u32 %v691, 7
    %v693 = vsub.s32 %v493, %v692
    %v694 = vrot.slane %v422, %v693
    %v695 = vsel %vm498, %v694, %v690
    %v696 = vlaneseq
    %v697 = vshrl.u32 %v696, 7
    %v698 = vsub.s32 %v481, %v697
    %v699 = vrot.slane %v425, %v698
    %v700 = vlaneseq
    %v701 = vshrl.u32 %v700, 7
    %v702 = vsub.s32 %v486, %v701
    %v703 = vrot.slane %v428, %v702
    %v704 = vsel %vm491, %v703, %v699
    %v705 = vlaneseq
    %v706 = vshrl.u32 %v705, 7
    %v707 = vsub.s32 %v493, %v706
    %v708 = vrot.slane %v431, %v707
    %v709 = vsel %vm498, %v708, %v704
    %vm710 = vcmask 1041409
    %v711 = vsel %vm710, %v513, %v499
    %vm712 = vcmask 1042434
    %v713 = vsel %vm712, %v527, %v711
    %vm714 = vcmask 1043459
    %v715 = vsel %vm714, %v541, %v713
    %vm716 = vcmask 1044484
    %v717 = vsel %vm716, %v555, %v715
    %vm718 = vcmask 1045509
    %v719 = vsel %vm718, %v569, %v717
    %vm720 = vcmask 1046534
    %v721 = vsel %vm720, %v583, %v719
    %vm722 = vcmask 1047559
    %v723 = vsel %vm722, %v597, %v721
    %v724 = vsel %vm710, %v625, %v611
    %v725 = vsel %vm712, %v639, %v724
    %v726 = vsel %vm714, %v653, %v725
    %v727 = vsel %vm716, %v667, %v726
    %v728 = vsel %vm718, %v681, %v727
    %v729 = vsel %vm720, %v695, %v728
    %v730 = vsel %vm722, %v709, %v729
    %v733 = vsel %vm286, %v723, 0.0
    %734 = vadd.xlane.f32.xlu0 %v733
    %v735 = vpop.xlane.xlu0 %734
    %v736 = vsel %vm286, %v730, 0.0
    %737 = vadd.xlane.f32.xlu0 %v736
    %v738 = vpop.xlane.xlu0 %737
    %v741 = vlaneseq
    %v742 = vshrl.u32 %v741, 7
    %v743 = vsub.s32 %v481, %v742
    %v744 = vrot.slane %v735, %v743
    %v745 = vlaneseq
    %v746 = vshrl.u32 %v745, 7
    %v747 = vsub.s32 %v481, %v746
    %v748 = vrot.slane %v738, %v747
    %v749 = vsel %vm710, %v748, %v744
    %v751 = vadd.f32 %v101, %v749
    %s752 = sld [smem:[#allocation6 + $0x1]]
    %v753 = vstv %s752
    %s754 = sld [smem:[#allocation3 + $0x4]]
    %v755 = vstv %s754
    %v756 = vmul.f32 %v755, %v82
    %v757 = vmul.f32 %v755, %v83
    %v758 = vmul.f32 %v755, %v84
    %v759 = vmul.f32 %v755, %v85
    %v760 = vmul.f32 %v755, %v86
    %v761 = vmul.f32 %v755, %v87
    %v762 = vadd.f32 %v753, %v756
    %v763 = vadd.f32 %v753, %v757
    %v764 = vadd.f32 %v753, %v758
    %v765 = vadd.f32 %v753, %v759
    %v766 = vadd.f32 %v753, %v760
    %v767 = vadd.f32 %v753, %v761
    %s768 = sld [smem:[#allocation3 + $0x5]]
    %v769 = vstv %s768
    %v770 = vmul.f32 %v769, %v82
    %v771 = vmul.f32 %v769, %v83
    %v772 = vmul.f32 %v769, %v84
    %v773 = vmul.f32 %v769, %v85
    %v774 = vmul.f32 %v769, %v86
    %v775 = vmul.f32 %v769, %v87
    %782 = vrot.lane.b32.xlu0 %v770, 127
    %v783 = vpop.permute.xlu0 %782
    %784 = vrot.lane.b32.xlu0 %v771, 127
    %v785 = vpop.permute.xlu0 %784
    %786 = vrot.lane.b32.xlu0 %v772, 127
    %v787 = vpop.permute.xlu0 %786
    %788 = vrot.lane.b32.xlu0 %v773, 127
    %v789 = vpop.permute.xlu0 %788
    %790 = vrot.lane.b32.xlu0 %v774, 127
    %v791 = vpop.permute.xlu0 %790
    %792 = vrot.lane.b32.xlu0 %v775, 127
    %v793 = vpop.permute.xlu0 %792
    %v800 = vadd.f32 %v762, %v783
    %v801 = vadd.f32 %v763, %v785
    %v802 = vadd.f32 %v764, %v787
    %v803 = vadd.f32 %v765, %v789
    %v804 = vadd.f32 %v766, %v791
    %v805 = vadd.f32 %v767, %v793
    %s806 = sld [smem:[#allocation3 + $0x6]]
    %v807 = vstv %s806
    %v808 = vmul.f32 %v807, %v88
    %v809 = vmul.f32 %v807, %v89
    %v810 = vmul.f32 %v807, %v90
    %v811 = vmul.f32 %v807, %v91
    %v812 = vmul.f32 %v807, %v92
    %v813 = vmul.f32 %v807, %v93
    %v814 = vadd.f32 %v800, %v808
    %v815 = vadd.f32 %v801, %v809
    %v816 = vadd.f32 %v802, %v810
    %v817 = vadd.f32 %v803, %v811
    %v818 = vadd.f32 %v804, %v812
    %v819 = vadd.f32 %v805, %v813
    %s820 = sld [smem:[#allocation3 + $0x7]]
    %v821 = vstv %s820
    %v822 = vmul.f32 %v821, %v88
    %v823 = vmul.f32 %v821, %v89
    %v824 = vmul.f32 %v821, %v90
    %v825 = vmul.f32 %v821, %v91
    %v826 = vmul.f32 %v821, %v92
    %v827 = vmul.f32 %v821, %v93
    %834 = vrot.lane.b32.xlu0 %v822, 127
    %v835 = vpop.permute.xlu0 %834
    %836 = vrot.lane.b32.xlu0 %v823, 127
    %v837 = vpop.permute.xlu0 %836
    %838 = vrot.lane.b32.xlu0 %v824, 127
    %v839 = vpop.permute.xlu0 %838
    %840 = vrot.lane.b32.xlu0 %v825, 127
    %v841 = vpop.permute.xlu0 %840
    %842 = vrot.lane.b32.xlu0 %v826, 127
    %v843 = vpop.permute.xlu0 %842
    %844 = vrot.lane.b32.xlu0 %v827, 127
    %v845 = vpop.permute.xlu0 %844
    %v852 = vadd.f32 %v814, %v835
    %v853 = vadd.f32 %v815, %v837
    %v854 = vadd.f32 %v816, %v839
    %v855 = vadd.f32 %v817, %v841
    %v856 = vadd.f32 %v818, %v843
    %v857 = vadd.f32 %v819, %v845
    %v858 = vmax.f32 %v852, 0.0
    %v859 = vmax.f32 %v853, 0.0
    %v860 = vmax.f32 %v854, 0.0
    %v861 = vmax.f32 %v855, 0.0
    %v862 = vmax.f32 %v856, 0.0
    %v863 = vmax.f32 %v857, 0.0
    %s864 = scalar_lea.vmem %s3, 24
    %v865 = vld [vmem:[%s864] sm:$0xff]
    %v866 = vld [vmem:[%s864 + $0x8] sm:$0xff]
    %v867 = vld [vmem:[%s864 + $0x10] sm:$0x1]
    %v868 = vld [vmem:[%s864 + $0x60] sm:$0xff]
    %v869 = vld [vmem:[%s864 + $0x68] sm:$0xff]
    %v870 = vld [vmem:[%s864 + $0x70] sm:$0x1]
    %v871 = vld [vmem:[%s864 + $0xc0] sm:$0xff]
    %v872 = vld [vmem:[%s864 + $0xc8] sm:$0xff]
    %v873 = vld [vmem:[%s864 + $0xd0] sm:$0x1]
    %v874 = vld [vmem:[%s864 + $0x120] sm:$0xff]
    %v875 = vld [vmem:[%s864 + $0x128] sm:$0xff]
    %v876 = vld [vmem:[%s864 + $0x130] sm:$0x1]
    %v877 = vld [vmem:[%s864 + $0x180] sm:$0xff]
    %v878 = vld [vmem:[%s864 + $0x188] sm:$0xff]
    %v879 = vld [vmem:[%s864 + $0x190] sm:$0x1]
    %v880 = vld [vmem:[%s864 + $0x1e0] sm:$0xff]
    %v881 = vld [vmem:[%s864 + $0x1e8] sm:$0xff]
    %v882 = vld [vmem:[%s864 + $0x1f0] sm:$0x1]
    %v883 = vld [vmem:[%s864 + $0x240] sm:$0xff]
    %v884 = vld [vmem:[%s864 + $0x248] sm:$0xff]
    %v885 = vld [vmem:[%s864 + $0x250] sm:$0x1]
    %v886 = vld [vmem:[%s864 + $0x2a0] sm:$0xff]
    %v887 = vld [vmem:[%s864 + $0x2a8] sm:$0xff]
    %v888 = vld [vmem:[%s864 + $0x2b0] sm:$0x1]
    %v889 = vmul.f32 %v858, %v865
    %v890 = vmul.f32 %v859, %v866
    %v891 = vmul.f32 %v860, %v867
    %v892 = vmul.f32 %v858, %v868
    %v893 = vmul.f32 %v859, %v869
    %v894 = vmul.f32 %v860, %v870
    %v895 = vmul.f32 %v858, %v871
    %v896 = vmul.f32 %v859, %v872
    %v897 = vmul.f32 %v860, %v873
    %v898 = vmul.f32 %v858, %v874
    %v899 = vmul.f32 %v859, %v875
    %v900 = vmul.f32 %v860, %v876
    %v901 = vmul.f32 %v858, %v877
    %v902 = vmul.f32 %v859, %v878
    %v903 = vmul.f32 %v860, %v879
    %v904 = vmul.f32 %v858, %v880
    %v905 = vmul.f32 %v859, %v881
    %v906 = vmul.f32 %v860, %v882
    %v907 = vmul.f32 %v858, %v883
    %v908 = vmul.f32 %v859, %v884
    %v909 = vmul.f32 %v860, %v885
    %v910 = vmul.f32 %v858, %v886
    %v911 = vmul.f32 %v859, %v887
    %v912 = vmul.f32 %v860, %v888
    %v913 = vmul.f32 %v861, %v865
    %v914 = vmul.f32 %v862, %v866
    %v915 = vmul.f32 %v863, %v867
    %v916 = vmul.f32 %v861, %v868
    %v917 = vmul.f32 %v862, %v869
    %v918 = vmul.f32 %v863, %v870
    %v919 = vmul.f32 %v861, %v871
    %v920 = vmul.f32 %v862, %v872
    %v921 = vmul.f32 %v863, %v873
    %v922 = vmul.f32 %v861, %v874
    %v923 = vmul.f32 %v862, %v875
    %v924 = vmul.f32 %v863, %v876
    %v925 = vmul.f32 %v861, %v877
    %v926 = vmul.f32 %v862, %v878
    %v927 = vmul.f32 %v863, %v879
    %v928 = vmul.f32 %v861, %v880
    %v929 = vmul.f32 %v862, %v881
    %v930 = vmul.f32 %v863, %v882
    %v931 = vmul.f32 %v861, %v883
    %v932 = vmul.f32 %v862, %v884
    %v933 = vmul.f32 %v863, %v885
    %v934 = vmul.f32 %v861, %v886
    %v935 = vmul.f32 %v862, %v887
    %v936 = vmul.f32 %v863, %v888
    %v937 = vsel %vm286, %v889, 0.0
    %938 = vadd.xlane.f32.xlu0 %v937
    %v939 = vpop.xlane.xlu0 %938
    %v940 = vsel %vm286, %v890, 0.0
    %941 = vadd.xlane.f32.xlu0 %v940
    %v942 = vpop.xlane.xlu0 %941
    %v943 = vsel %vm293, %v891, 0.0
    %944 = vadd.xlane.f32.xlu0 %v943
    %v945 = vpop.xlane.xlu0 %944
    %v946 = vsel %vm286, %v892, 0.0
    %947 = vadd.xlane.f32.xlu0 %v946
    %v948 = vpop.xlane.xlu0 %947
    %v949 = vsel %vm286, %v893, 0.0
    %950 = vadd.xlane.f32.xlu0 %v949
    %v951 = vpop.xlane.xlu0 %950
    %v952 = vsel %vm293, %v894, 0.0
    %953 = vadd.xlane.f32.xlu0 %v952
    %v954 = vpop.xlane.xlu0 %953
    %v955 = vsel %vm286, %v895, 0.0
    %956 = vadd.xlane.f32.xlu0 %v955
    %v957 = vpop.xlane.xlu0 %956
    %v958 = vsel %vm286, %v896, 0.0
    %959 = vadd.xlane.f32.xlu0 %v958
    %v960 = vpop.xlane.xlu0 %959
    %v961 = vsel %vm293, %v897, 0.0
    %962 = vadd.xlane.f32.xlu0 %v961
    %v963 = vpop.xlane.xlu0 %962
    %v964 = vsel %vm286, %v898, 0.0
    %965 = vadd.xlane.f32.xlu0 %v964
    %v966 = vpop.xlane.xlu0 %965
    %v967 = vsel %vm286, %v899, 0.0
    %968 = vadd.xlane.f32.xlu0 %v967
    %v969 = vpop.xlane.xlu0 %968
    %v970 = vsel %vm293, %v900, 0.0
    %971 = vadd.xlane.f32.xlu0 %v970
    %v972 = vpop.xlane.xlu0 %971
    %v973 = vsel %vm286, %v901, 0.0
    %974 = vadd.xlane.f32.xlu0 %v973
    %v975 = vpop.xlane.xlu0 %974
    %v976 = vsel %vm286, %v902, 0.0
    %977 = vadd.xlane.f32.xlu0 %v976
    %v978 = vpop.xlane.xlu0 %977
    %v979 = vsel %vm293, %v903, 0.0
    %980 = vadd.xlane.f32.xlu0 %v979
    %v981 = vpop.xlane.xlu0 %980
    %v982 = vsel %vm286, %v904, 0.0
    %983 = vadd.xlane.f32.xlu0 %v982
    %v984 = vpop.xlane.xlu0 %983
    %v985 = vsel %vm286, %v905, 0.0
    %986 = vadd.xlane.f32.xlu0 %v985
    %v987 = vpop.xlane.xlu0 %986
    %v988 = vsel %vm293, %v906, 0.0
    %989 = vadd.xlane.f32.xlu0 %v988
    %v990 = vpop.xlane.xlu0 %989
    %v991 = vsel %vm286, %v907, 0.0
    %992 = vadd.xlane.f32.xlu0 %v991
    %v993 = vpop.xlane.xlu0 %992
    %v994 = vsel %vm286, %v908, 0.0
    %995 = vadd.xlane.f32.xlu0 %v994
    %v996 = vpop.xlane.xlu0 %995
    %v997 = vsel %vm293, %v909, 0.0
    %998 = vadd.xlane.f32.xlu0 %v997
    %v999 = vpop.xlane.xlu0 %998
    %v1000 = vsel %vm286, %v910, 0.0
    %1001 = vadd.xlane.f32.xlu0 %v1000
    %v1002 = vpop.xlane.xlu0 %1001
    %v1003 = vsel %vm286, %v911, 0.0
    %1004 = vadd.xlane.f32.xlu0 %v1003
    %v1005 = vpop.xlane.xlu0 %1004
    %v1006 = vsel %vm293, %v912, 0.0
    %1007 = vadd.xlane.f32.xlu0 %v1006
    %v1008 = vpop.xlane.xlu0 %1007
    %v1009 = vsel %vm286, %v913, 0.0
    %1010 = vadd.xlane.f32.xlu0 %v1009
    %v1011 = vpop.xlane.xlu0 %1010
    %v1012 = vsel %vm286, %v914, 0.0
    %1013 = vadd.xlane.f32.xlu0 %v1012
    %v1014 = vpop.xlane.xlu0 %1013
    %v1015 = vsel %vm293, %v915, 0.0
    %1016 = vadd.xlane.f32.xlu0 %v1015
    %v1017 = vpop.xlane.xlu0 %1016
    %v1018 = vsel %vm286, %v916, 0.0
    %1019 = vadd.xlane.f32.xlu0 %v1018
    %v1020 = vpop.xlane.xlu0 %1019
    %v1021 = vsel %vm286, %v917, 0.0
    %1022 = vadd.xlane.f32.xlu0 %v1021
    %v1023 = vpop.xlane.xlu0 %1022
    %v1024 = vsel %vm293, %v918, 0.0
    %1025 = vadd.xlane.f32.xlu0 %v1024
    %v1026 = vpop.xlane.xlu0 %1025
    %v1027 = vsel %vm286, %v919, 0.0
    %1028 = vadd.xlane.f32.xlu0 %v1027
    %v1029 = vpop.xlane.xlu0 %1028
    %v1030 = vsel %vm286, %v920, 0.0
    %1031 = vadd.xlane.f32.xlu0 %v1030
    %v1032 = vpop.xlane.xlu0 %1031
    %v1033 = vsel %vm293, %v921, 0.0
    %1034 = vadd.xlane.f32.xlu0 %v1033
    %v1035 = vpop.xlane.xlu0 %1034
    %v1036 = vsel %vm286, %v922, 0.0
    %1037 = vadd.xlane.f32.xlu0 %v1036
    %v1038 = vpop.xlane.xlu0 %1037
    %v1039 = vsel %vm286, %v923, 0.0
    %1040 = vadd.xlane.f32.xlu0 %v1039
    %v1041 = vpop.xlane.xlu0 %1040
    %v1042 = vsel %vm293, %v924, 0.0
    %1043 = vadd.xlane.f32.xlu0 %v1042
    %v1044 = vpop.xlane.xlu0 %1043
    %v1045 = vsel %vm286, %v925, 0.0
    %1046 = vadd.xlane.f32.xlu0 %v1045
    %v1047 = vpop.xlane.xlu0 %1046
    %v1048 = vsel %vm286, %v926, 0.0
    %1049 = vadd.xlane.f32.xlu0 %v1048
    %v1050 = vpop.xlane.xlu0 %1049
    %v1051 = vsel %vm293, %v927, 0.0
    %1052 = vadd.xlane.f32.xlu0 %v1051
    %v1053 = vpop.xlane.xlu0 %1052
    %v1054 = vsel %vm286, %v928, 0.0
    %1055 = vadd.xlane.f32.xlu0 %v1054
    %v1056 = vpop.xlane.xlu0 %1055
    %v1057 = vsel %vm286, %v929, 0.0
    %1058 = vadd.xlane.f32.xlu0 %v1057
    %v1059 = vpop.xlane.xlu0 %1058
    %v1060 = vsel %vm293, %v930, 0.0
    %1061 = vadd.xlane.f32.xlu0 %v1060
    %v1062 = vpop.xlane.xlu0 %1061
    %v1063 = vsel %vm286, %v931, 0.0
    %1064 = vadd.xlane.f32.xlu0 %v1063
    %v1065 = vpop.xlane.xlu0 %1064
    %v1066 = vsel %vm286, %v932, 0.0
    %1067 = vadd.xlane.f32.xlu0 %v1066
    %v1068 = vpop.xlane.xlu0 %1067
    %v1069 = vsel %vm293, %v933, 0.0
    %1070 = vadd.xlane.f32.xlu0 %v1069
    %v1071 = vpop.xlane.xlu0 %1070
    %v1072 = vsel %vm286, %v934, 0.0
    %1073 = vadd.xlane.f32.xlu0 %v1072
    %v1074 = vpop.xlane.xlu0 %1073
    %v1075 = vsel %vm286, %v935, 0.0
    %1076 = vadd.xlane.f32.xlu0 %v1075
    %v1077 = vpop.xlane.xlu0 %1076
    %v1078 = vsel %vm293, %v936, 0.0
    %1079 = vadd.xlane.f32.xlu0 %v1078
    %v1080 = vpop.xlane.xlu0 %1079
    %v1129 = vlaneseq
    %v1130 = vshrl.u32 %v1129, 7
    %v1131 = vsub.s32 %v481, %v1130
    %v1132 = vrot.slane %v939, %v1131
    %v1133 = vlaneseq
    %v1134 = vshrl.u32 %v1133, 7
    %v1135 = vsub.s32 %v486, %v1134
    %v1136 = vrot.slane %v942, %v1135
    %v1137 = vsel %vm491, %v1136, %v1132
    %v1138 = vlaneseq
    %v1139 = vshrl.u32 %v1138, 7
    %v1140 = vsub.s32 %v493, %v1139
    %v1141 = vrot.slane %v945, %v1140
    %v1142 = vsel %vm498, %v1141, %v1137
    %v1143 = vlaneseq
    %v1144 = vshrl.u32 %v1143, 7
    %v1145 = vsub.s32 %v481, %v1144
    %v1146 = vrot.slane %v948, %v1145
    %v1147 = vlaneseq
    %v1148 = vshrl.u32 %v1147, 7
    %v1149 = vsub.s32 %v486, %v1148
    %v1150 = vrot.slane %v951, %v1149
    %v1151 = vsel %vm491, %v1150, %v1146
    %v1152 = vlaneseq
    %v1153 = vshrl.u32 %v1152, 7
    %v1154 = vsub.s32 %v493, %v1153
    %v1155 = vrot.slane %v954, %v1154
    %v1156 = vsel %vm498, %v1155, %v1151
    %v1157 = vlaneseq
    %v1158 = vshrl.u32 %v1157, 7
    %v1159 = vsub.s32 %v481, %v1158
    %v1160 = vrot.slane %v957, %v1159
    %v1161 = vlaneseq
    %v1162 = vshrl.u32 %v1161, 7
    %v1163 = vsub.s32 %v486, %v1162
    %v1164 = vrot.slane %v960, %v1163
    %v1165 = vsel %vm491, %v1164, %v1160
    %v1166 = vlaneseq
    %v1167 = vshrl.u32 %v1166, 7
    %v1168 = vsub.s32 %v493, %v1167
    %v1169 = vrot.slane %v963, %v1168
    %v1170 = vsel %vm498, %v1169, %v1165
    %v1171 = vlaneseq
    %v1172 = vshrl.u32 %v1171, 7
    %v1173 = vsub.s32 %v481, %v1172
    %v1174 = vrot.slane %v966, %v1173
    %v1175 = vlaneseq
    %v1176 = vshrl.u32 %v1175, 7
    %v1177 = vsub.s32 %v486, %v1176
    %v1178 = vrot.slane %v969, %v1177
    %v1179 = vsel %vm491, %v1178, %v1174
    %v1180 = vlaneseq
    %v1181 = vshrl.u32 %v1180, 7
    %v1182 = vsub.s32 %v493, %v1181
    %v1183 = vrot.slane %v972, %v1182
    %v1184 = vsel %vm498, %v1183, %v1179
    %v1185 = vlaneseq
    %v1186 = vshrl.u32 %v1185, 7
    %v1187 = vsub.s32 %v481, %v1186
    %v1188 = vrot.slane %v975, %v1187
    %v1189 = vlaneseq
    %v1190 = vshrl.u32 %v1189, 7
    %v1191 = vsub.s32 %v486, %v1190
    %v1192 = vrot.slane %v978, %v1191
    %v1193 = vsel %vm491, %v1192, %v1188
    %v1194 = vlaneseq
    %v1195 = vshrl.u32 %v1194, 7
    %v1196 = vsub.s32 %v493, %v1195
    %v1197 = vrot.slane %v981, %v1196
    %v1198 = vsel %vm498, %v1197, %v1193
    %v1199 = vlaneseq
    %v1200 = vshrl.u32 %v1199, 7
    %v1201 = vsub.s32 %v481, %v1200
    %v1202 = vrot.slane %v984, %v1201
    %v1203 = vlaneseq
    %v1204 = vshrl.u32 %v1203, 7
    %v1205 = vsub.s32 %v486, %v1204
    %v1206 = vrot.slane %v987, %v1205
    %v1207 = vsel %vm491, %v1206, %v1202
    %v1208 = vlaneseq
    %v1209 = vshrl.u32 %v1208, 7
    %v1210 = vsub.s32 %v493, %v1209
    %v1211 = vrot.slane %v990, %v1210
    %v1212 = vsel %vm498, %v1211, %v1207
    %v1213 = vlaneseq
    %v1214 = vshrl.u32 %v1213, 7
    %v1215 = vsub.s32 %v481, %v1214
    %v1216 = vrot.slane %v993, %v1215
    %v1217 = vlaneseq
    %v1218 = vshrl.u32 %v1217, 7
    %v1219 = vsub.s32 %v486, %v1218
    %v1220 = vrot.slane %v996, %v1219
    %v1221 = vsel %vm491, %v1220, %v1216
    %v1222 = vlaneseq
    %v1223 = vshrl.u32 %v1222, 7
    %v1224 = vsub.s32 %v493, %v1223
    %v1225 = vrot.slane %v999, %v1224
    %v1226 = vsel %vm498, %v1225, %v1221
    %v1227 = vlaneseq
    %v1228 = vshrl.u32 %v1227, 7
    %v1229 = vsub.s32 %v481, %v1228
    %v1230 = vrot.slane %v1002, %v1229
    %v1231 = vlaneseq
    %v1232 = vshrl.u32 %v1231, 7
    %v1233 = vsub.s32 %v486, %v1232
    %v1234 = vrot.slane %v1005, %v1233
    %v1235 = vsel %vm491, %v1234, %v1230
    %v1236 = vlaneseq
    %v1237 = vshrl.u32 %v1236, 7
    %v1238 = vsub.s32 %v493, %v1237
    %v1239 = vrot.slane %v1008, %v1238
    %v1240 = vsel %vm498, %v1239, %v1235
    %v1241 = vlaneseq
    %v1242 = vshrl.u32 %v1241, 7
    %v1243 = vsub.s32 %v481, %v1242
    %v1244 = vrot.slane %v1011, %v1243
    %v1245 = vlaneseq
    %v1246 = vshrl.u32 %v1245, 7
    %v1247 = vsub.s32 %v486, %v1246
    %v1248 = vrot.slane %v1014, %v1247
    %v1249 = vsel %vm491, %v1248, %v1244
    %v1250 = vlaneseq
    %v1251 = vshrl.u32 %v1250, 7
    %v1252 = vsub.s32 %v493, %v1251
    %v1253 = vrot.slane %v1017, %v1252
    %v1254 = vsel %vm498, %v1253, %v1249
    %v1255 = vlaneseq
    %v1256 = vshrl.u32 %v1255, 7
    %v1257 = vsub.s32 %v481, %v1256
    %v1258 = vrot.slane %v1020, %v1257
    %v1259 = vlaneseq
    %v1260 = vshrl.u32 %v1259, 7
    %v1261 = vsub.s32 %v486, %v1260
    %v1262 = vrot.slane %v1023, %v1261
    %v1263 = vsel %vm491, %v1262, %v1258
    %v1264 = vlaneseq
    %v1265 = vshrl.u32 %v1264, 7
    %v1266 = vsub.s32 %v493, %v1265
    %v1267 = vrot.slane %v1026, %v1266
    %v1268 = vsel %vm498, %v1267, %v1263
    %v1269 = vlaneseq
    %v1270 = vshrl.u32 %v1269, 7
    %v1271 = vsub.s32 %v481, %v1270
    %v1272 = vrot.slane %v1029, %v1271
    %v1273 = vlaneseq
    %v1274 = vshrl.u32 %v1273, 7
    %v1275 = vsub.s32 %v486, %v1274
    %v1276 = vrot.slane %v1032, %v1275
    %v1277 = vsel %vm491, %v1276, %v1272
    %v1278 = vlaneseq
    %v1279 = vshrl.u32 %v1278, 7
    %v1280 = vsub.s32 %v493, %v1279
    %v1281 = vrot.slane %v1035, %v1280
    %v1282 = vsel %vm498, %v1281, %v1277
    %v1283 = vlaneseq
    %v1284 = vshrl.u32 %v1283, 7
    %v1285 = vsub.s32 %v481, %v1284
    %v1286 = vrot.slane %v1038, %v1285
    %v1287 = vlaneseq
    %v1288 = vshrl.u32 %v1287, 7
    %v1289 = vsub.s32 %v486, %v1288
    %v1290 = vrot.slane %v1041, %v1289
    %v1291 = vsel %vm491, %v1290, %v1286
    %v1292 = vlaneseq
    %v1293 = vshrl.u32 %v1292, 7
    %v1294 = vsub.s32 %v493, %v1293
    %v1295 = vrot.slane %v1044, %v1294
    %v1296 = vsel %vm498, %v1295, %v1291
    %v1297 = vlaneseq
    %v1298 = vshrl.u32 %v1297, 7
    %v1299 = vsub.s32 %v481, %v1298
    %v1300 = vrot.slane %v1047, %v1299
    %v1301 = vlaneseq
    %v1302 = vshrl.u32 %v1301, 7
    %v1303 = vsub.s32 %v486, %v1302
    %v1304 = vrot.slane %v1050, %v1303
    %v1305 = vsel %vm491, %v1304, %v1300
    %v1306 = vlaneseq
    %v1307 = vshrl.u32 %v1306, 7
    %v1308 = vsub.s32 %v493, %v1307
    %v1309 = vrot.slane %v1053, %v1308
    %v1310 = vsel %vm498, %v1309, %v1305
    %v1311 = vlaneseq
    %v1312 = vshrl.u32 %v1311, 7
    %v1313 = vsub.s32 %v481, %v1312
    %v1314 = vrot.slane %v1056, %v1313
    %v1315 = vlaneseq
    %v1316 = vshrl.u32 %v1315, 7
    %v1317 = vsub.s32 %v486, %v1316
    %v1318 = vrot.slane %v1059, %v1317
    %v1319 = vsel %vm491, %v1318, %v1314
    %v1320 = vlaneseq
    %v1321 = vshrl.u32 %v1320, 7
    %v1322 = vsub.s32 %v493, %v1321
    %v1323 = vrot.slane %v1062, %v1322
    %v1324 = vsel %vm498, %v1323, %v1319
    %v1325 = vlaneseq
    %v1326 = vshrl.u32 %v1325, 7
    %v1327 = vsub.s32 %v481, %v1326
    %v1328 = vrot.slane %v1065, %v1327
    %v1329 = vlaneseq
    %v1330 = vshrl.u32 %v1329, 7
    %v1331 = vsub.s32 %v486, %v1330
    %v1332 = vrot.slane %v1068, %v1331
    %v1333 = vsel %vm491, %v1332, %v1328
    %v1334 = vlaneseq
    %v1335 = vshrl.u32 %v1334, 7
    %v1336 = vsub.s32 %v493, %v1335
    %v1337 = vrot.slane %v1071, %v1336
    %v1338 = vsel %vm498, %v1337, %v1333
    %v1339 = vlaneseq
    %v1340 = vshrl.u32 %v1339, 7
    %v1341 = vsub.s32 %v481, %v1340
    %v1342 = vrot.slane %v1074, %v1341
    %v1343 = vlaneseq
    %v1344 = vshrl.u32 %v1343, 7
    %v1345 = vsub.s32 %v486, %v1344
    %v1346 = vrot.slane %v1077, %v1345
    %v1347 = vsel %vm491, %v1346, %v1342
    %v1348 = vlaneseq
    %v1349 = vshrl.u32 %v1348, 7
    %v1350 = vsub.s32 %v493, %v1349
    %v1351 = vrot.slane %v1080, %v1350
    %v1352 = vsel %vm498, %v1351, %v1347
    %v1353 = vsel %vm710, %v1156, %v1142
    %v1354 = vsel %vm712, %v1170, %v1353
    %v1355 = vsel %vm714, %v1184, %v1354
    %v1356 = vsel %vm716, %v1198, %v1355
    %v1357 = vsel %vm718, %v1212, %v1356
    %v1358 = vsel %vm720, %v1226, %v1357
    %v1359 = vsel %vm722, %v1240, %v1358
    %v1360 = vsel %vm710, %v1268, %v1254
    %v1361 = vsel %vm712, %v1282, %v1360
    %v1362 = vsel %vm714, %v1296, %v1361
    %v1363 = vsel %vm716, %v1310, %v1362
    %v1364 = vsel %vm718, %v1324, %v1363
    %v1365 = vsel %vm720, %v1338, %v1364
    %v1366 = vsel %vm722, %v1352, %v1365
    %v1369 = vsel %vm286, %v1359, 0.0
    %1370 = vadd.xlane.f32.xlu0 %v1369
    %v1371 = vpop.xlane.xlu0 %1370
    %v1372 = vsel %vm286, %v1366, 0.0
    %1373 = vadd.xlane.f32.xlu0 %v1372
    %v1374 = vpop.xlane.xlu0 %1373
    %v1377 = vlaneseq
    %v1378 = vshrl.u32 %v1377, 7
    %v1379 = vsub.s32 %v481, %v1378
    %v1380 = vrot.slane %v1371, %v1379
    %v1381 = vlaneseq
    %v1382 = vshrl.u32 %v1381, 7
    %v1383 = vsub.s32 %v481, %v1382
    %v1384 = vrot.slane %v1374, %v1383
    %v1385 = vsel %vm710, %v1384, %v1380
    %v1387 = vadd.f32 %v751, %v1385
    %s1388 = sld [smem:[#allocation6 + $0x2]]
    %v1389 = vstv %s1388
    %s1390 = sld [smem:[#allocation3 + $0x8]]
    %v1391 = vstv %s1390
    %v1392 = vmul.f32 %v1391, %v82
    %v1393 = vmul.f32 %v1391, %v83
    %v1394 = vmul.f32 %v1391, %v84
    %v1395 = vmul.f32 %v1391, %v85
    %v1396 = vmul.f32 %v1391, %v86
    %v1397 = vmul.f32 %v1391, %v87
    %v1398 = vadd.f32 %v1389, %v1392
    %v1399 = vadd.f32 %v1389, %v1393
    %v1400 = vadd.f32 %v1389, %v1394
    %v1401 = vadd.f32 %v1389, %v1395
    %v1402 = vadd.f32 %v1389, %v1396
    %v1403 = vadd.f32 %v1389, %v1397
    %s1404 = sld [smem:[#allocation3 + $0x9]]
    %v1405 = vstv %s1404
    %v1406 = vmul.f32 %v1405, %v82
    %v1407 = vmul.f32 %v1405, %v83
    %v1408 = vmul.f32 %v1405, %v84
    %v1409 = vmul.f32 %v1405, %v85
    %v1410 = vmul.f32 %v1405, %v86
    %v1411 = vmul.f32 %v1405, %v87
    %1418 = vrot.lane.b32.xlu0 %v1406, 127
    %v1419 = vpop.permute.xlu0 %1418
    %1420 = vrot.lane.b32.xlu0 %v1407, 127
    %v1421 = vpop.permute.xlu0 %1420
    %1422 = vrot.lane.b32.xlu0 %v1408, 127
    %v1423 = vpop.permute.xlu0 %1422
    %1424 = vrot.lane.b32.xlu0 %v1409, 127
    %v1425 = vpop.permute.xlu0 %1424
    %1426 = vrot.lane.b32.xlu0 %v1410, 127
    %v1427 = vpop.permute.xlu0 %1426
    %1428 = vrot.lane.b32.xlu0 %v1411, 127
    %v1429 = vpop.permute.xlu0 %1428
    %v1436 = vadd.f32 %v1398, %v1419
    %v1437 = vadd.f32 %v1399, %v1421
    %v1438 = vadd.f32 %v1400, %v1423
    %v1439 = vadd.f32 %v1401, %v1425
    %v1440 = vadd.f32 %v1402, %v1427
    %v1441 = vadd.f32 %v1403, %v1429
    %s1442 = sld [smem:[#allocation3 + $0xa]]
    %v1443 = vstv %s1442
    %v1444 = vmul.f32 %v1443, %v88
    %v1445 = vmul.f32 %v1443, %v89
    %v1446 = vmul.f32 %v1443, %v90
    %v1447 = vmul.f32 %v1443, %v91
    %v1448 = vmul.f32 %v1443, %v92
    %v1449 = vmul.f32 %v1443, %v93
    %v1450 = vadd.f32 %v1436, %v1444
    %v1451 = vadd.f32 %v1437, %v1445
    %v1452 = vadd.f32 %v1438, %v1446
    %v1453 = vadd.f32 %v1439, %v1447
    %v1454 = vadd.f32 %v1440, %v1448
    %v1455 = vadd.f32 %v1441, %v1449
    %s1456 = sld [smem:[#allocation3 + $0xb]]
    %v1457 = vstv %s1456
    %v1458 = vmul.f32 %v1457, %v88
    %v1459 = vmul.f32 %v1457, %v89
    %v1460 = vmul.f32 %v1457, %v90
    %v1461 = vmul.f32 %v1457, %v91
    %v1462 = vmul.f32 %v1457, %v92
    %v1463 = vmul.f32 %v1457, %v93
    %1470 = vrot.lane.b32.xlu0 %v1458, 127
    %v1471 = vpop.permute.xlu0 %1470
    %1472 = vrot.lane.b32.xlu0 %v1459, 127
    %v1473 = vpop.permute.xlu0 %1472
    %1474 = vrot.lane.b32.xlu0 %v1460, 127
    %v1475 = vpop.permute.xlu0 %1474
    %1476 = vrot.lane.b32.xlu0 %v1461, 127
    %v1477 = vpop.permute.xlu0 %1476
    %1478 = vrot.lane.b32.xlu0 %v1462, 127
    %v1479 = vpop.permute.xlu0 %1478
    %1480 = vrot.lane.b32.xlu0 %v1463, 127
    %v1481 = vpop.permute.xlu0 %1480
    %v1488 = vadd.f32 %v1450, %v1471
    %v1489 = vadd.f32 %v1451, %v1473
    %v1490 = vadd.f32 %v1452, %v1475
    %v1491 = vadd.f32 %v1453, %v1477
    %v1492 = vadd.f32 %v1454, %v1479
    %v1493 = vadd.f32 %v1455, %v1481
    %v1494 = vmax.f32 %v1488, 0.0
    %v1495 = vmax.f32 %v1489, 0.0
    %v1496 = vmax.f32 %v1490, 0.0
    %v1497 = vmax.f32 %v1491, 0.0
    %v1498 = vmax.f32 %v1492, 0.0
    %v1499 = vmax.f32 %v1493, 0.0
    %s1500 = scalar_lea.vmem %s3, 48
    %v1501 = vld [vmem:[%s1500] sm:$0xff]
    %v1502 = vld [vmem:[%s1500 + $0x8] sm:$0xff]
    %v1503 = vld [vmem:[%s1500 + $0x10] sm:$0x1]
    %v1504 = vld [vmem:[%s1500 + $0x60] sm:$0xff]
    %v1505 = vld [vmem:[%s1500 + $0x68] sm:$0xff]
    %v1506 = vld [vmem:[%s1500 + $0x70] sm:$0x1]
    %v1507 = vld [vmem:[%s1500 + $0xc0] sm:$0xff]
    %v1508 = vld [vmem:[%s1500 + $0xc8] sm:$0xff]
    %v1509 = vld [vmem:[%s1500 + $0xd0] sm:$0x1]
    %v1510 = vld [vmem:[%s1500 + $0x120] sm:$0xff]
    %v1511 = vld [vmem:[%s1500 + $0x128] sm:$0xff]
    %v1512 = vld [vmem:[%s1500 + $0x130] sm:$0x1]
    %v1513 = vld [vmem:[%s1500 + $0x180] sm:$0xff]
    %v1514 = vld [vmem:[%s1500 + $0x188] sm:$0xff]
    %v1515 = vld [vmem:[%s1500 + $0x190] sm:$0x1]
    %v1516 = vld [vmem:[%s1500 + $0x1e0] sm:$0xff]
    %v1517 = vld [vmem:[%s1500 + $0x1e8] sm:$0xff]
    %v1518 = vld [vmem:[%s1500 + $0x1f0] sm:$0x1]
    %v1519 = vld [vmem:[%s1500 + $0x240] sm:$0xff]
    %v1520 = vld [vmem:[%s1500 + $0x248] sm:$0xff]
    %v1521 = vld [vmem:[%s1500 + $0x250] sm:$0x1]
    %v1522 = vld [vmem:[%s1500 + $0x2a0] sm:$0xff]
    %v1523 = vld [vmem:[%s1500 + $0x2a8] sm:$0xff]
    %v1524 = vld [vmem:[%s1500 + $0x2b0] sm:$0x1]
    %v1525 = vmul.f32 %v1494, %v1501
    %v1526 = vmul.f32 %v1495, %v1502
    %v1527 = vmul.f32 %v1496, %v1503
    %v1528 = vmul.f32 %v1494, %v1504
    %v1529 = vmul.f32 %v1495, %v1505
    %v1530 = vmul.f32 %v1496, %v1506
    %v1531 = vmul.f32 %v1494, %v1507
    %v1532 = vmul.f32 %v1495, %v1508
    %v1533 = vmul.f32 %v1496, %v1509
    %v1534 = vmul.f32 %v1494, %v1510
    %v1535 = vmul.f32 %v1495, %v1511
    %v1536 = vmul.f32 %v1496, %v1512
    %v1537 = vmul.f32 %v1494, %v1513
    %v1538 = vmul.f32 %v1495, %v1514
    %v1539 = vmul.f32 %v1496, %v1515
    %v1540 = vmul.f32 %v1494, %v1516
    %v1541 = vmul.f32 %v1495, %v1517
    %v1542 = vmul.f32 %v1496, %v1518
    %v1543 = vmul.f32 %v1494, %v1519
    %v1544 = vmul.f32 %v1495, %v1520
    %v1545 = vmul.f32 %v1496, %v1521
    %v1546 = vmul.f32 %v1494, %v1522
    %v1547 = vmul.f32 %v1495, %v1523
    %v1548 = vmul.f32 %v1496, %v1524
    %v1549 = vmul.f32 %v1497, %v1501
    %v1550 = vmul.f32 %v1498, %v1502
    %v1551 = vmul.f32 %v1499, %v1503
    %v1552 = vmul.f32 %v1497, %v1504
    %v1553 = vmul.f32 %v1498, %v1505
    %v1554 = vmul.f32 %v1499, %v1506
    %v1555 = vmul.f32 %v1497, %v1507
    %v1556 = vmul.f32 %v1498, %v1508
    %v1557 = vmul.f32 %v1499, %v1509
    %v1558 = vmul.f32 %v1497, %v1510
    %v1559 = vmul.f32 %v1498, %v1511
    %v1560 = vmul.f32 %v1499, %v1512
    %v1561 = vmul.f32 %v1497, %v1513
    %v1562 = vmul.f32 %v1498, %v1514
    %v1563 = vmul.f32 %v1499, %v1515
    %v1564 = vmul.f32 %v1497, %v1516
    %v1565 = vmul.f32 %v1498, %v1517
    %v1566 = vmul.f32 %v1499, %v1518
    %v1567 = vmul.f32 %v1497, %v1519
    %v1568 = vmul.f32 %v1498, %v1520
    %v1569 = vmul.f32 %v1499, %v1521
    %v1570 = vmul.f32 %v1497, %v1522
    %v1571 = vmul.f32 %v1498, %v1523
    %v1572 = vmul.f32 %v1499, %v1524
    %v1573 = vsel %vm286, %v1525, 0.0
    %1574 = vadd.xlane.f32.xlu0 %v1573
    %v1575 = vpop.xlane.xlu0 %1574
    %v1576 = vsel %vm286, %v1526, 0.0
    %1577 = vadd.xlane.f32.xlu0 %v1576
    %v1578 = vpop.xlane.xlu0 %1577
    %v1579 = vsel %vm293, %v1527, 0.0
    %1580 = vadd.xlane.f32.xlu0 %v1579
    %v1581 = vpop.xlane.xlu0 %1580
    %v1582 = vsel %vm286, %v1528, 0.0
    %1583 = vadd.xlane.f32.xlu0 %v1582
    %v1584 = vpop.xlane.xlu0 %1583
    %v1585 = vsel %vm286, %v1529, 0.0
    %1586 = vadd.xlane.f32.xlu0 %v1585
    %v1587 = vpop.xlane.xlu0 %1586
    %v1588 = vsel %vm293, %v1530, 0.0
    %1589 = vadd.xlane.f32.xlu0 %v1588
    %v1590 = vpop.xlane.xlu0 %1589
    %v1591 = vsel %vm286, %v1531, 0.0
    %1592 = vadd.xlane.f32.xlu0 %v1591
    %v1593 = vpop.xlane.xlu0 %1592
    %v1594 = vsel %vm286, %v1532, 0.0
    %1595 = vadd.xlane.f32.xlu0 %v1594
    %v1596 = vpop.xlane.xlu0 %1595
    %v1597 = vsel %vm293, %v1533, 0.0
    %1598 = vadd.xlane.f32.xlu0 %v1597
    %v1599 = vpop.xlane.xlu0 %1598
    %v1600 = vsel %vm286, %v1534, 0.0
    %1601 = vadd.xlane.f32.xlu0 %v1600
    %v1602 = vpop.xlane.xlu0 %1601
    %v1603 = vsel %vm286, %v1535, 0.0
    %1604 = vadd.xlane.f32.xlu0 %v1603
    %v1605 = vpop.xlane.xlu0 %1604
    %v1606 = vsel %vm293, %v1536, 0.0
    %1607 = vadd.xlane.f32.xlu0 %v1606
    %v1608 = vpop.xlane.xlu0 %1607
    %v1609 = vsel %vm286, %v1537, 0.0
    %1610 = vadd.xlane.f32.xlu0 %v1609
    %v1611 = vpop.xlane.xlu0 %1610
    %v1612 = vsel %vm286, %v1538, 0.0
    %1613 = vadd.xlane.f32.xlu0 %v1612
    %v1614 = vpop.xlane.xlu0 %1613
    %v1615 = vsel %vm293, %v1539, 0.0
    %1616 = vadd.xlane.f32.xlu0 %v1615
    %v1617 = vpop.xlane.xlu0 %1616
    %v1618 = vsel %vm286, %v1540, 0.0
    %1619 = vadd.xlane.f32.xlu0 %v1618
    %v1620 = vpop.xlane.xlu0 %1619
    %v1621 = vsel %vm286, %v1541, 0.0
    %1622 = vadd.xlane.f32.xlu0 %v1621
    %v1623 = vpop.xlane.xlu0 %1622
    %v1624 = vsel %vm293, %v1542, 0.0
    %1625 = vadd.xlane.f32.xlu0 %v1624
    %v1626 = vpop.xlane.xlu0 %1625
    %v1627 = vsel %vm286, %v1543, 0.0
    %1628 = vadd.xlane.f32.xlu0 %v1627
    %v1629 = vpop.xlane.xlu0 %1628
    %v1630 = vsel %vm286, %v1544, 0.0
    %1631 = vadd.xlane.f32.xlu0 %v1630
    %v1632 = vpop.xlane.xlu0 %1631
    %v1633 = vsel %vm293, %v1545, 0.0
    %1634 = vadd.xlane.f32.xlu0 %v1633
    %v1635 = vpop.xlane.xlu0 %1634
    %v1636 = vsel %vm286, %v1546, 0.0
    %1637 = vadd.xlane.f32.xlu0 %v1636
    %v1638 = vpop.xlane.xlu0 %1637
    %v1639 = vsel %vm286, %v1547, 0.0
    %1640 = vadd.xlane.f32.xlu0 %v1639
    %v1641 = vpop.xlane.xlu0 %1640
    %v1642 = vsel %vm293, %v1548, 0.0
    %1643 = vadd.xlane.f32.xlu0 %v1642
    %v1644 = vpop.xlane.xlu0 %1643
    %v1645 = vsel %vm286, %v1549, 0.0
    %1646 = vadd.xlane.f32.xlu0 %v1645
    %v1647 = vpop.xlane.xlu0 %1646
    %v1648 = vsel %vm286, %v1550, 0.0
    %1649 = vadd.xlane.f32.xlu0 %v1648
    %v1650 = vpop.xlane.xlu0 %1649
    %v1651 = vsel %vm293, %v1551, 0.0
    %1652 = vadd.xlane.f32.xlu0 %v1651
    %v1653 = vpop.xlane.xlu0 %1652
    %v1654 = vsel %vm286, %v1552, 0.0
    %1655 = vadd.xlane.f32.xlu0 %v1654
    %v1656 = vpop.xlane.xlu0 %1655
    %v1657 = vsel %vm286, %v1553, 0.0
    %1658 = vadd.xlane.f32.xlu0 %v1657
    %v1659 = vpop.xlane.xlu0 %1658
    %v1660 = vsel %vm293, %v1554, 0.0
    %1661 = vadd.xlane.f32.xlu0 %v1660
    %v1662 = vpop.xlane.xlu0 %1661
    %v1663 = vsel %vm286, %v1555, 0.0
    %1664 = vadd.xlane.f32.xlu0 %v1663
    %v1665 = vpop.xlane.xlu0 %1664
    %v1666 = vsel %vm286, %v1556, 0.0
    %1667 = vadd.xlane.f32.xlu0 %v1666
    %v1668 = vpop.xlane.xlu0 %1667
    %v1669 = vsel %vm293, %v1557, 0.0
    %1670 = vadd.xlane.f32.xlu0 %v1669
    %v1671 = vpop.xlane.xlu0 %1670
    %v1672 = vsel %vm286, %v1558, 0.0
    %1673 = vadd.xlane.f32.xlu0 %v1672
    %v1674 = vpop.xlane.xlu0 %1673
    %v1675 = vsel %vm286, %v1559, 0.0
    %1676 = vadd.xlane.f32.xlu0 %v1675
    %v1677 = vpop.xlane.xlu0 %1676
    %v1678 = vsel %vm293, %v1560, 0.0
    %1679 = vadd.xlane.f32.xlu0 %v1678
    %v1680 = vpop.xlane.xlu0 %1679
    %v1681 = vsel %vm286, %v1561, 0.0
    %1682 = vadd.xlane.f32.xlu0 %v1681
    %v1683 = vpop.xlane.xlu0 %1682
    %v1684 = vsel %vm286, %v1562, 0.0
    %1685 = vadd.xlane.f32.xlu0 %v1684
    %v1686 = vpop.xlane.xlu0 %1685
    %v1687 = vsel %vm293, %v1563, 0.0
    %1688 = vadd.xlane.f32.xlu0 %v1687
    %v1689 = vpop.xlane.xlu0 %1688
    %v1690 = vsel %vm286, %v1564, 0.0
    %1691 = vadd.xlane.f32.xlu0 %v1690
    %v1692 = vpop.xlane.xlu0 %1691
    %v1693 = vsel %vm286, %v1565, 0.0
    %1694 = vadd.xlane.f32.xlu0 %v1693
    %v1695 = vpop.xlane.xlu0 %1694
    %v1696 = vsel %vm293, %v1566, 0.0
    %1697 = vadd.xlane.f32.xlu0 %v1696
    %v1698 = vpop.xlane.xlu0 %1697
    %v1699 = vsel %vm286, %v1567, 0.0
    %1700 = vadd.xlane.f32.xlu0 %v1699
    %v1701 = vpop.xlane.xlu0 %1700
    %v1702 = vsel %vm286, %v1568, 0.0
    %1703 = vadd.xlane.f32.xlu0 %v1702
    %v1704 = vpop.xlane.xlu0 %1703
    %v1705 = vsel %vm293, %v1569, 0.0
    %1706 = vadd.xlane.f32.xlu0 %v1705
    %v1707 = vpop.xlane.xlu0 %1706
    %v1708 = vsel %vm286, %v1570, 0.0
    %1709 = vadd.xlane.f32.xlu0 %v1708
    %v1710 = vpop.xlane.xlu0 %1709
    %v1711 = vsel %vm286, %v1571, 0.0
    %1712 = vadd.xlane.f32.xlu0 %v1711
    %v1713 = vpop.xlane.xlu0 %1712
    %v1714 = vsel %vm293, %v1572, 0.0
    %1715 = vadd.xlane.f32.xlu0 %v1714
    %v1716 = vpop.xlane.xlu0 %1715
    %v1765 = vlaneseq
    %v1766 = vshrl.u32 %v1765, 7
    %v1767 = vsub.s32 %v481, %v1766
    %v1768 = vrot.slane %v1575, %v1767
    %v1769 = vlaneseq
    %v1770 = vshrl.u32 %v1769, 7
    %v1771 = vsub.s32 %v486, %v1770
    %v1772 = vrot.slane %v1578, %v1771
    %v1773 = vsel %vm491, %v1772, %v1768
    %v1774 = vlaneseq
    %v1775 = vshrl.u32 %v1774, 7
    %v1776 = vsub.s32 %v493, %v1775
    %v1777 = vrot.slane %v1581, %v1776
    %v1778 = vsel %vm498, %v1777, %v1773
    %v1779 = vlaneseq
    %v1780 = vshrl.u32 %v1779, 7
    %v1781 = vsub.s32 %v481, %v1780
    %v1782 = vrot.slane %v1584, %v1781
    %v1783 = vlaneseq
    %v1784 = vshrl.u32 %v1783, 7
    %v1785 = vsub.s32 %v486, %v1784
    %v1786 = vrot.slane %v1587, %v1785
    %v1787 = vsel %vm491, %v1786, %v1782
    %v1788 = vlaneseq
    %v1789 = vshrl.u32 %v1788, 7
    %v1790 = vsub.s32 %v493, %v1789
    %v1791 = vrot.slane %v1590, %v1790
    %v1792 = vsel %vm498, %v1791, %v1787
    %v1793 = vlaneseq
    %v1794 = vshrl.u32 %v1793, 7
    %v1795 = vsub.s32 %v481, %v1794
    %v1796 = vrot.slane %v1593, %v1795
    %v1797 = vlaneseq
    %v1798 = vshrl.u32 %v1797, 7
    %v1799 = vsub.s32 %v486, %v1798
    %v1800 = vrot.slane %v1596, %v1799
    %v1801 = vsel %vm491, %v1800, %v1796
    %v1802 = vlaneseq
    %v1803 = vshrl.u32 %v1802, 7
    %v1804 = vsub.s32 %v493, %v1803
    %v1805 = vrot.slane %v1599, %v1804
    %v1806 = vsel %vm498, %v1805, %v1801
    %v1807 = vlaneseq
    %v1808 = vshrl.u32 %v1807, 7
    %v1809 = vsub.s32 %v481, %v1808
    %v1810 = vrot.slane %v1602, %v1809
    %v1811 = vlaneseq
    %v1812 = vshrl.u32 %v1811, 7
    %v1813 = vsub.s32 %v486, %v1812
    %v1814 = vrot.slane %v1605, %v1813
    %v1815 = vsel %vm491, %v1814, %v1810
    %v1816 = vlaneseq
    %v1817 = vshrl.u32 %v1816, 7
    %v1818 = vsub.s32 %v493, %v1817
    %v1819 = vrot.slane %v1608, %v1818
    %v1820 = vsel %vm498, %v1819, %v1815
    %v1821 = vlaneseq
    %v1822 = vshrl.u32 %v1821, 7
    %v1823 = vsub.s32 %v481, %v1822
    %v1824 = vrot.slane %v1611, %v1823
    %v1825 = vlaneseq
    %v1826 = vshrl.u32 %v1825, 7
    %v1827 = vsub.s32 %v486, %v1826
    %v1828 = vrot.slane %v1614, %v1827
    %v1829 = vsel %vm491, %v1828, %v1824
    %v1830 = vlaneseq
    %v1831 = vshrl.u32 %v1830, 7
    %v1832 = vsub.s32 %v493, %v1831
    %v1833 = vrot.slane %v1617, %v1832
    %v1834 = vsel %vm498, %v1833, %v1829
    %v1835 = vlaneseq
    %v1836 = vshrl.u32 %v1835, 7
    %v1837 = vsub.s32 %v481, %v1836
    %v1838 = vrot.slane %v1620, %v1837
    %v1839 = vlaneseq
    %v1840 = vshrl.u32 %v1839, 7
    %v1841 = vsub.s32 %v486, %v1840
    %v1842 = vrot.slane %v1623, %v1841
    %v1843 = vsel %vm491, %v1842, %v1838
    %v1844 = vlaneseq
    %v1845 = vshrl.u32 %v1844, 7
    %v1846 = vsub.s32 %v493, %v1845
    %v1847 = vrot.slane %v1626, %v1846
    %v1848 = vsel %vm498, %v1847, %v1843
    %v1849 = vlaneseq
    %v1850 = vshrl.u32 %v1849, 7
    %v1851 = vsub.s32 %v481, %v1850
    %v1852 = vrot.slane %v1629, %v1851
    %v1853 = vlaneseq
    %v1854 = vshrl.u32 %v1853, 7
    %v1855 = vsub.s32 %v486, %v1854
    %v1856 = vrot.slane %v1632, %v1855
    %v1857 = vsel %vm491, %v1856, %v1852
    %v1858 = vlaneseq
    %v1859 = vshrl.u32 %v1858, 7
    %v1860 = vsub.s32 %v493, %v1859
    %v1861 = vrot.slane %v1635, %v1860
    %v1862 = vsel %vm498, %v1861, %v1857
    %v1863 = vlaneseq
    %v1864 = vshrl.u32 %v1863, 7
    %v1865 = vsub.s32 %v481, %v1864
    %v1866 = vrot.slane %v1638, %v1865
    %v1867 = vlaneseq
    %v1868 = vshrl.u32 %v1867, 7
    %v1869 = vsub.s32 %v486, %v1868
    %v1870 = vrot.slane %v1641, %v1869
    %v1871 = vsel %vm491, %v1870, %v1866
    %v1872 = vlaneseq
    %v1873 = vshrl.u32 %v1872, 7
    %v1874 = vsub.s32 %v493, %v1873
    %v1875 = vrot.slane %v1644, %v1874
    %v1876 = vsel %vm498, %v1875, %v1871
    %v1877 = vlaneseq
    %v1878 = vshrl.u32 %v1877, 7
    %v1879 = vsub.s32 %v481, %v1878
    %v1880 = vrot.slane %v1647, %v1879
    %v1881 = vlaneseq
    %v1882 = vshrl.u32 %v1881, 7
    %v1883 = vsub.s32 %v486, %v1882
    %v1884 = vrot.slane %v1650, %v1883
    %v1885 = vsel %vm491, %v1884, %v1880
    %v1886 = vlaneseq
    %v1887 = vshrl.u32 %v1886, 7
    %v1888 = vsub.s32 %v493, %v1887
    %v1889 = vrot.slane %v1653, %v1888
    %v1890 = vsel %vm498, %v1889, %v1885
    %v1891 = vlaneseq
    %v1892 = vshrl.u32 %v1891, 7
    %v1893 = vsub.s32 %v481, %v1892
    %v1894 = vrot.slane %v1656, %v1893
    %v1895 = vlaneseq
    %v1896 = vshrl.u32 %v1895, 7
    %v1897 = vsub.s32 %v486, %v1896
    %v1898 = vrot.slane %v1659, %v1897
    %v1899 = vsel %vm491, %v1898, %v1894
    %v1900 = vlaneseq
    %v1901 = vshrl.u32 %v1900, 7
    %v1902 = vsub.s32 %v493, %v1901
    %v1903 = vrot.slane %v1662, %v1902
    %v1904 = vsel %vm498, %v1903, %v1899
    %v1905 = vlaneseq
    %v1906 = vshrl.u32 %v1905, 7
    %v1907 = vsub.s32 %v481, %v1906
    %v1908 = vrot.slane %v1665, %v1907
    %v1909 = vlaneseq
    %v1910 = vshrl.u32 %v1909, 7
    %v1911 = vsub.s32 %v486, %v1910
    %v1912 = vrot.slane %v1668, %v1911
    %v1913 = vsel %vm491, %v1912, %v1908
    %v1914 = vlaneseq
    %v1915 = vshrl.u32 %v1914, 7
    %v1916 = vsub.s32 %v493, %v1915
    %v1917 = vrot.slane %v1671, %v1916
    %v1918 = vsel %vm498, %v1917, %v1913
    %v1919 = vlaneseq
    %v1920 = vshrl.u32 %v1919, 7
    %v1921 = vsub.s32 %v481, %v1920
    %v1922 = vrot.slane %v1674, %v1921
    %v1923 = vlaneseq
    %v1924 = vshrl.u32 %v1923, 7
    %v1925 = vsub.s32 %v486, %v1924
    %v1926 = vrot.slane %v1677, %v1925
    %v1927 = vsel %vm491, %v1926, %v1922
    %v1928 = vlaneseq
    %v1929 = vshrl.u32 %v1928, 7
    %v1930 = vsub.s32 %v493, %v1929
    %v1931 = vrot.slane %v1680, %v1930
    %v1932 = vsel %vm498, %v1931, %v1927
    %v1933 = vlaneseq
    %v1934 = vshrl.u32 %v1933, 7
    %v1935 = vsub.s32 %v481, %v1934
    %v1936 = vrot.slane %v1683, %v1935
    %v1937 = vlaneseq
    %v1938 = vshrl.u32 %v1937, 7
    %v1939 = vsub.s32 %v486, %v1938
    %v1940 = vrot.slane %v1686, %v1939
    %v1941 = vsel %vm491, %v1940, %v1936
    %v1942 = vlaneseq
    %v1943 = vshrl.u32 %v1942, 7
    %v1944 = vsub.s32 %v493, %v1943
    %v1945 = vrot.slane %v1689, %v1944
    %v1946 = vsel %vm498, %v1945, %v1941
    %v1947 = vlaneseq
    %v1948 = vshrl.u32 %v1947, 7
    %v1949 = vsub.s32 %v481, %v1948
    %v1950 = vrot.slane %v1692, %v1949
    %v1951 = vlaneseq
    %v1952 = vshrl.u32 %v1951, 7
    %v1953 = vsub.s32 %v486, %v1952
    %v1954 = vrot.slane %v1695, %v1953
    %v1955 = vsel %vm491, %v1954, %v1950
    %v1956 = vlaneseq
    %v1957 = vshrl.u32 %v1956, 7
    %v1958 = vsub.s32 %v493, %v1957
    %v1959 = vrot.slane %v1698, %v1958
    %v1960 = vsel %vm498, %v1959, %v1955
    %v1961 = vlaneseq
    %v1962 = vshrl.u32 %v1961, 7
    %v1963 = vsub.s32 %v481, %v1962
    %v1964 = vrot.slane %v1701, %v1963
    %v1965 = vlaneseq
    %v1966 = vshrl.u32 %v1965, 7
    %v1967 = vsub.s32 %v486, %v1966
    %v1968 = vrot.slane %v1704, %v1967
    %v1969 = vsel %vm491, %v1968, %v1964
    %v1970 = vlaneseq
    %v1971 = vshrl.u32 %v1970, 7
    %v1972 = vsub.s32 %v493, %v1971
    %v1973 = vrot.slane %v1707, %v1972
    %v1974 = vsel %vm498, %v1973, %v1969
    %v1975 = vlaneseq
    %v1976 = vshrl.u32 %v1975, 7
    %v1977 = vsub.s32 %v481, %v1976
    %v1978 = vrot.slane %v1710, %v1977
    %v1979 = vlaneseq
    %v1980 = vshrl.u32 %v1979, 7
    %v1981 = vsub.s32 %v486, %v1980
    %v1982 = vrot.slane %v1713, %v1981
    %v1983 = vsel %vm491, %v1982, %v1978
    %v1984 = vlaneseq
    %v1985 = vshrl.u32 %v1984, 7
    %v1986 = vsub.s32 %v493, %v1985
    %v1987 = vrot.slane %v1716, %v1986
    %v1988 = vsel %vm498, %v1987, %v1983
    %v1989 = vsel %vm710, %v1792, %v1778
    %v1990 = vsel %vm712, %v1806, %v1989
    %v1991 = vsel %vm714, %v1820, %v1990
    %v1992 = vsel %vm716, %v1834, %v1991
    %v1993 = vsel %vm718, %v1848, %v1992
    %v1994 = vsel %vm720, %v1862, %v1993
    %v1995 = vsel %vm722, %v1876, %v1994
    %v1996 = vsel %vm710, %v1904, %v1890
    %v1997 = vsel %vm712, %v1918, %v1996
    %v1998 = vsel %vm714, %v1932, %v1997
    %v1999 = vsel %vm716, %v1946, %v1998
    %v2000 = vsel %vm718, %v1960, %v1999
    %v2001 = vsel %vm720, %v1974, %v2000
    %v2002 = vsel %vm722, %v1988, %v2001
    %v2005 = vsel %vm286, %v1995, 0.0
    %2006 = vadd.xlane.f32.xlu0 %v2005
    %v2007 = vpop.xlane.xlu0 %2006
    %v2008 = vsel %vm286, %v2002, 0.0
    %2009 = vadd.xlane.f32.xlu0 %v2008
    %v2010 = vpop.xlane.xlu0 %2009
    %v2013 = vlaneseq
    %v2014 = vshrl.u32 %v2013, 7
    %v2015 = vsub.s32 %v481, %v2014
    %v2016 = vrot.slane %v2007, %v2015
    %v2017 = vlaneseq
    %v2018 = vshrl.u32 %v2017, 7
    %v2019 = vsub.s32 %v481, %v2018
    %v2020 = vrot.slane %v2010, %v2019
    %v2021 = vsel %vm710, %v2020, %v2016
    %v2023 = vadd.f32 %v1387, %v2021
    %s2024 = sld [smem:[#allocation6 + $0x3]]
    %v2025 = vstv %s2024
    %s2026 = sld [smem:[#allocation3 + $0xc]]
    %v2027 = vstv %s2026
    %v2028 = vmul.f32 %v2027, %v82
    %v2029 = vmul.f32 %v2027, %v83
    %v2030 = vmul.f32 %v2027, %v84
    %v2031 = vmul.f32 %v2027, %v85
    %v2032 = vmul.f32 %v2027, %v86
    %v2033 = vmul.f32 %v2027, %v87
    %v2034 = vadd.f32 %v2025, %v2028
    %v2035 = vadd.f32 %v2025, %v2029
    %v2036 = vadd.f32 %v2025, %v2030
    %v2037 = vadd.f32 %v2025, %v2031
    %v2038 = vadd.f32 %v2025, %v2032
    %v2039 = vadd.f32 %v2025, %v2033
    %s2040 = sld [smem:[#allocation3 + $0xd]]
    %v2041 = vstv %s2040
    %v2042 = vmul.f32 %v2041, %v82
    %v2043 = vmul.f32 %v2041, %v83
    %v2044 = vmul.f32 %v2041, %v84
    %v2045 = vmul.f32 %v2041, %v85
    %v2046 = vmul.f32 %v2041, %v86
    %v2047 = vmul.f32 %v2041, %v87
    %2054 = vrot.lane.b32.xlu0 %v2042, 127
    %v2055 = vpop.permute.xlu0 %2054
    %2056 = vrot.lane.b32.xlu0 %v2043, 127
    %v2057 = vpop.permute.xlu0 %2056
    %2058 = vrot.lane.b32.xlu0 %v2044, 127
    %v2059 = vpop.permute.xlu0 %2058
    %2060 = vrot.lane.b32.xlu0 %v2045, 127
    %v2061 = vpop.permute.xlu0 %2060
    %2062 = vrot.lane.b32.xlu0 %v2046, 127
    %v2063 = vpop.permute.xlu0 %2062
    %2064 = vrot.lane.b32.xlu0 %v2047, 127
    %v2065 = vpop.permute.xlu0 %2064
    %v2072 = vadd.f32 %v2034, %v2055
    %v2073 = vadd.f32 %v2035, %v2057
    %v2074 = vadd.f32 %v2036, %v2059
    %v2075 = vadd.f32 %v2037, %v2061
    %v2076 = vadd.f32 %v2038, %v2063
    %v2077 = vadd.f32 %v2039, %v2065
    %s2078 = sld [smem:[#allocation3 + $0xe]]
    %v2079 = vstv %s2078
    %v2080 = vmul.f32 %v2079, %v88
    %v2081 = vmul.f32 %v2079, %v89
    %v2082 = vmul.f32 %v2079, %v90
    %v2083 = vmul.f32 %v2079, %v91
    %v2084 = vmul.f32 %v2079, %v92
    %v2085 = vmul.f32 %v2079, %v93
    %v2086 = vadd.f32 %v2072, %v2080
    %v2087 = vadd.f32 %v2073, %v2081
    %v2088 = vadd.f32 %v2074, %v2082
    %v2089 = vadd.f32 %v2075, %v2083
    %v2090 = vadd.f32 %v2076, %v2084
    %v2091 = vadd.f32 %v2077, %v2085
    %s2092 = sld [smem:[#allocation3 + $0xf]]
    %v2093 = vstv %s2092
    %v2094 = vmul.f32 %v2093, %v88
    %v2095 = vmul.f32 %v2093, %v89
    %v2096 = vmul.f32 %v2093, %v90
    %v2097 = vmul.f32 %v2093, %v91
    %v2098 = vmul.f32 %v2093, %v92
    %v2099 = vmul.f32 %v2093, %v93
    %2106 = vrot.lane.b32.xlu0 %v2094, 127
    %v2107 = vpop.permute.xlu0 %2106
    %2108 = vrot.lane.b32.xlu0 %v2095, 127
    %v2109 = vpop.permute.xlu0 %2108
    %2110 = vrot.lane.b32.xlu0 %v2096, 127
    %v2111 = vpop.permute.xlu0 %2110
    %2112 = vrot.lane.b32.xlu0 %v2097, 127
    %v2113 = vpop.permute.xlu0 %2112
    %2114 = vrot.lane.b32.xlu0 %v2098, 127
    %v2115 = vpop.permute.xlu0 %2114
    %2116 = vrot.lane.b32.xlu0 %v2099, 127
    %v2117 = vpop.permute.xlu0 %2116
    %v2124 = vadd.f32 %v2086, %v2107
    %v2125 = vadd.f32 %v2087, %v2109
    %v2126 = vadd.f32 %v2088, %v2111
    %v2127 = vadd.f32 %v2089, %v2113
    %v2128 = vadd.f32 %v2090, %v2115
    %v2129 = vadd.f32 %v2091, %v2117
    %v2130 = vmax.f32 %v2124, 0.0
    %v2131 = vmax.f32 %v2125, 0.0
    %v2132 = vmax.f32 %v2126, 0.0
    %v2133 = vmax.f32 %v2127, 0.0
    %v2134 = vmax.f32 %v2128, 0.0
    %v2135 = vmax.f32 %v2129, 0.0
    %s2136 = scalar_lea.vmem %s3, 72
    %v2137 = vld [vmem:[%s2136] sm:$0xff]
    %v2138 = vld [vmem:[%s2136 + $0x8] sm:$0xff]
    %v2139 = vld [vmem:[%s2136 + $0x10] sm:$0x1]
    %v2140 = vld [vmem:[%s2136 + $0x60] sm:$0xff]
    %v2141 = vld [vmem:[%s2136 + $0x68] sm:$0xff]
    %v2142 = vld [vmem:[%s2136 + $0x70] sm:$0x1]
    %v2143 = vld [vmem:[%s2136 + $0xc0] sm:$0xff]
    %v2144 = vld [vmem:[%s2136 + $0xc8] sm:$0xff]
    %v2145 = vld [vmem:[%s2136 + $0xd0] sm:$0x1]
    %v2146 = vld [vmem:[%s2136 + $0x120] sm:$0xff]
    %v2147 = vld [vmem:[%s2136 + $0x128] sm:$0xff]
    %v2148 = vld [vmem:[%s2136 + $0x130] sm:$0x1]
    %v2149 = vld [vmem:[%s2136 + $0x180] sm:$0xff]
    %v2150 = vld [vmem:[%s2136 + $0x188] sm:$0xff]
    %v2151 = vld [vmem:[%s2136 + $0x190] sm:$0x1]
    %v2152 = vld [vmem:[%s2136 + $0x1e0] sm:$0xff]
    %v2153 = vld [vmem:[%s2136 + $0x1e8] sm:$0xff]
    %v2154 = vld [vmem:[%s2136 + $0x1f0] sm:$0x1]
    %v2155 = vld [vmem:[%s2136 + $0x240] sm:$0xff]
    %v2156 = vld [vmem:[%s2136 + $0x248] sm:$0xff]
    %v2157 = vld [vmem:[%s2136 + $0x250] sm:$0x1]
    %v2158 = vld [vmem:[%s2136 + $0x2a0] sm:$0xff]
    %v2159 = vld [vmem:[%s2136 + $0x2a8] sm:$0xff]
    %v2160 = vld [vmem:[%s2136 + $0x2b0] sm:$0x1]
    %v2161 = vmul.f32 %v2130, %v2137
    %v2162 = vmul.f32 %v2131, %v2138
    %v2163 = vmul.f32 %v2132, %v2139
    %v2164 = vmul.f32 %v2130, %v2140
    %v2165 = vmul.f32 %v2131, %v2141
    %v2166 = vmul.f32 %v2132, %v2142
    %v2167 = vmul.f32 %v2130, %v2143
    %v2168 = vmul.f32 %v2131, %v2144
    %v2169 = vmul.f32 %v2132, %v2145
    %v2170 = vmul.f32 %v2130, %v2146
    %v2171 = vmul.f32 %v2131, %v2147
    %v2172 = vmul.f32 %v2132, %v2148
    %v2173 = vmul.f32 %v2130, %v2149
    %v2174 = vmul.f32 %v2131, %v2150
    %v2175 = vmul.f32 %v2132, %v2151
    %v2176 = vmul.f32 %v2130, %v2152
    %v2177 = vmul.f32 %v2131, %v2153
    %v2178 = vmul.f32 %v2132, %v2154
    %v2179 = vmul.f32 %v2130, %v2155
    %v2180 = vmul.f32 %v2131, %v2156
    %v2181 = vmul.f32 %v2132, %v2157
    %v2182 = vmul.f32 %v2130, %v2158
    %v2183 = vmul.f32 %v2131, %v2159
    %v2184 = vmul.f32 %v2132, %v2160
    %v2185 = vmul.f32 %v2133, %v2137
    %v2186 = vmul.f32 %v2134, %v2138
    %v2187 = vmul.f32 %v2135, %v2139
    %v2188 = vmul.f32 %v2133, %v2140
    %v2189 = vmul.f32 %v2134, %v2141
    %v2190 = vmul.f32 %v2135, %v2142
    %v2191 = vmul.f32 %v2133, %v2143
    %v2192 = vmul.f32 %v2134, %v2144
    %v2193 = vmul.f32 %v2135, %v2145
    %v2194 = vmul.f32 %v2133, %v2146
    %v2195 = vmul.f32 %v2134, %v2147
    %v2196 = vmul.f32 %v2135, %v2148
    %v2197 = vmul.f32 %v2133, %v2149
    %v2198 = vmul.f32 %v2134, %v2150
    %v2199 = vmul.f32 %v2135, %v2151
    %v2200 = vmul.f32 %v2133, %v2152
    %v2201 = vmul.f32 %v2134, %v2153
    %v2202 = vmul.f32 %v2135, %v2154
    %v2203 = vmul.f32 %v2133, %v2155
    %v2204 = vmul.f32 %v2134, %v2156
    %v2205 = vmul.f32 %v2135, %v2157
    %v2206 = vmul.f32 %v2133, %v2158
    %v2207 = vmul.f32 %v2134, %v2159
    %v2208 = vmul.f32 %v2135, %v2160
    %v2209 = vsel %vm286, %v2161, 0.0
    %2210 = vadd.xlane.f32.xlu0 %v2209
    %v2211 = vpop.xlane.xlu0 %2210
    %v2212 = vsel %vm286, %v2162, 0.0
    %2213 = vadd.xlane.f32.xlu0 %v2212
    %v2214 = vpop.xlane.xlu0 %2213
    %v2215 = vsel %vm293, %v2163, 0.0
    %2216 = vadd.xlane.f32.xlu0 %v2215
    %v2217 = vpop.xlane.xlu0 %2216
    %v2218 = vsel %vm286, %v2164, 0.0
    %2219 = vadd.xlane.f32.xlu0 %v2218
    %v2220 = vpop.xlane.xlu0 %2219
    %v2221 = vsel %vm286, %v2165, 0.0
    %2222 = vadd.xlane.f32.xlu0 %v2221
    %v2223 = vpop.xlane.xlu0 %2222
    %v2224 = vsel %vm293, %v2166, 0.0
    %2225 = vadd.xlane.f32.xlu0 %v2224
    %v2226 = vpop.xlane.xlu0 %2225
    %v2227 = vsel %vm286, %v2167, 0.0
    %2228 = vadd.xlane.f32.xlu0 %v2227
    %v2229 = vpop.xlane.xlu0 %2228
    %v2230 = vsel %vm286, %v2168, 0.0
    %2231 = vadd.xlane.f32.xlu0 %v2230
    %v2232 = vpop.xlane.xlu0 %2231
    %v2233 = vsel %vm293, %v2169, 0.0
    %2234 = vadd.xlane.f32.xlu0 %v2233
    %v2235 = vpop.xlane.xlu0 %2234
    %v2236 = vsel %vm286, %v2170, 0.0
    %2237 = vadd.xlane.f32.xlu0 %v2236
    %v2238 = vpop.xlane.xlu0 %2237
    %v2239 = vsel %vm286, %v2171, 0.0
    %2240 = vadd.xlane.f32.xlu0 %v2239
    %v2241 = vpop.xlane.xlu0 %2240
    %v2242 = vsel %vm293, %v2172, 0.0
    %2243 = vadd.xlane.f32.xlu0 %v2242
    %v2244 = vpop.xlane.xlu0 %2243
    %v2245 = vsel %vm286, %v2173, 0.0
    %2246 = vadd.xlane.f32.xlu0 %v2245
    %v2247 = vpop.xlane.xlu0 %2246
    %v2248 = vsel %vm286, %v2174, 0.0
    %2249 = vadd.xlane.f32.xlu0 %v2248
    %v2250 = vpop.xlane.xlu0 %2249
    %v2251 = vsel %vm293, %v2175, 0.0
    %2252 = vadd.xlane.f32.xlu0 %v2251
    %v2253 = vpop.xlane.xlu0 %2252
    %v2254 = vsel %vm286, %v2176, 0.0
    %2255 = vadd.xlane.f32.xlu0 %v2254
    %v2256 = vpop.xlane.xlu0 %2255
    %v2257 = vsel %vm286, %v2177, 0.0
    %2258 = vadd.xlane.f32.xlu0 %v2257
    %v2259 = vpop.xlane.xlu0 %2258
    %v2260 = vsel %vm293, %v2178, 0.0
    %2261 = vadd.xlane.f32.xlu0 %v2260
    %v2262 = vpop.xlane.xlu0 %2261
    %v2263 = vsel %vm286, %v2179, 0.0
    %2264 = vadd.xlane.f32.xlu0 %v2263
    %v2265 = vpop.xlane.xlu0 %2264
    %v2266 = vsel %vm286, %v2180, 0.0
    %2267 = vadd.xlane.f32.xlu0 %v2266
    %v2268 = vpop.xlane.xlu0 %2267
    %v2269 = vsel %vm293, %v2181, 0.0
    %2270 = vadd.xlane.f32.xlu0 %v2269
    %v2271 = vpop.xlane.xlu0 %2270
    %v2272 = vsel %vm286, %v2182, 0.0
    %2273 = vadd.xlane.f32.xlu0 %v2272
    %v2274 = vpop.xlane.xlu0 %2273
    %v2275 = vsel %vm286, %v2183, 0.0
    %2276 = vadd.xlane.f32.xlu0 %v2275
    %v2277 = vpop.xlane.xlu0 %2276
    %v2278 = vsel %vm293, %v2184, 0.0
    %2279 = vadd.xlane.f32.xlu0 %v2278
    %v2280 = vpop.xlane.xlu0 %2279
    %v2281 = vsel %vm286, %v2185, 0.0
    %2282 = vadd.xlane.f32.xlu0 %v2281
    %v2283 = vpop.xlane.xlu0 %2282
    %v2284 = vsel %vm286, %v2186, 0.0
    %2285 = vadd.xlane.f32.xlu0 %v2284
    %v2286 = vpop.xlane.xlu0 %2285
    %v2287 = vsel %vm293, %v2187, 0.0
    %2288 = vadd.xlane.f32.xlu0 %v2287
    %v2289 = vpop.xlane.xlu0 %2288
    %v2290 = vsel %vm286, %v2188, 0.0
    %2291 = vadd.xlane.f32.xlu0 %v2290
    %v2292 = vpop.xlane.xlu0 %2291
    %v2293 = vsel %vm286, %v2189, 0.0
    %2294 = vadd.xlane.f32.xlu0 %v2293
    %v2295 = vpop.xlane.xlu0 %2294
    %v2296 = vsel %vm293, %v2190, 0.0
    %2297 = vadd.xlane.f32.xlu0 %v2296
    %v2298 = vpop.xlane.xlu0 %2297
    %v2299 = vsel %vm286, %v2191, 0.0
    %2300 = vadd.xlane.f32.xlu0 %v2299
    %v2301 = vpop.xlane.xlu0 %2300
    %v2302 = vsel %vm286, %v2192, 0.0
    %2303 = vadd.xlane.f32.xlu0 %v2302
    %v2304 = vpop.xlane.xlu0 %2303
    %v2305 = vsel %vm293, %v2193, 0.0
    %2306 = vadd.xlane.f32.xlu0 %v2305
    %v2307 = vpop.xlane.xlu0 %2306
    %v2308 = vsel %vm286, %v2194, 0.0
    %2309 = vadd.xlane.f32.xlu0 %v2308
    %v2310 = vpop.xlane.xlu0 %2309
    %v2311 = vsel %vm286, %v2195, 0.0
    %2312 = vadd.xlane.f32.xlu0 %v2311
    %v2313 = vpop.xlane.xlu0 %2312
    %v2314 = vsel %vm293, %v2196, 0.0
    %2315 = vadd.xlane.f32.xlu0 %v2314
    %v2316 = vpop.xlane.xlu0 %2315
    %v2317 = vsel %vm286, %v2197, 0.0
    %2318 = vadd.xlane.f32.xlu0 %v2317
    %v2319 = vpop.xlane.xlu0 %2318
    %v2320 = vsel %vm286, %v2198, 0.0
    %2321 = vadd.xlane.f32.xlu0 %v2320
    %v2322 = vpop.xlane.xlu0 %2321
    %v2323 = vsel %vm293, %v2199, 0.0
    %2324 = vadd.xlane.f32.xlu0 %v2323
    %v2325 = vpop.xlane.xlu0 %2324
    %v2326 = vsel %vm286, %v2200, 0.0
    %2327 = vadd.xlane.f32.xlu0 %v2326
    %v2328 = vpop.xlane.xlu0 %2327
    %v2329 = vsel %vm286, %v2201, 0.0
    %2330 = vadd.xlane.f32.xlu0 %v2329
    %v2331 = vpop.xlane.xlu0 %2330
    %v2332 = vsel %vm293, %v2202, 0.0
    %2333 = vadd.xlane.f32.xlu0 %v2332
    %v2334 = vpop.xlane.xlu0 %2333
    %v2335 = vsel %vm286, %v2203, 0.0
    %2336 = vadd.xlane.f32.xlu0 %v2335
    %v2337 = vpop.xlane.xlu0 %2336
    %v2338 = vsel %vm286, %v2204, 0.0
    %2339 = vadd.xlane.f32.xlu0 %v2338
    %v2340 = vpop.xlane.xlu0 %2339
    %v2341 = vsel %vm293, %v2205, 0.0
    %2342 = vadd.xlane.f32.xlu0 %v2341
    %v2343 = vpop.xlane.xlu0 %2342
    %v2344 = vsel %vm286, %v2206, 0.0
    %2345 = vadd.xlane.f32.xlu0 %v2344
    %v2346 = vpop.xlane.xlu0 %2345
    %v2347 = vsel %vm286, %v2207, 0.0
    %2348 = vadd.xlane.f32.xlu0 %v2347
    %v2349 = vpop.xlane.xlu0 %2348
    %v2350 = vsel %vm293, %v2208, 0.0
    %2351 = vadd.xlane.f32.xlu0 %v2350
    %v2352 = vpop.xlane.xlu0 %2351
    %v2401 = vlaneseq
    %v2402 = vshrl.u32 %v2401, 7
    %v2403 = vsub.s32 %v481, %v2402
    %v2404 = vrot.slane %v2211, %v2403
    %v2405 = vlaneseq
    %v2406 = vshrl.u32 %v2405, 7
    %v2407 = vsub.s32 %v486, %v2406
    %v2408 = vrot.slane %v2214, %v2407
    %v2409 = vsel %vm491, %v2408, %v2404
    %v2410 = vlaneseq
    %v2411 = vshrl.u32 %v2410, 7
    %v2412 = vsub.s32 %v493, %v2411
    %v2413 = vrot.slane %v2217, %v2412
    %v2414 = vsel %vm498, %v2413, %v2409
    %v2415 = vlaneseq
    %v2416 = vshrl.u32 %v2415, 7
    %v2417 = vsub.s32 %v481, %v2416
    %v2418 = vrot.slane %v2220, %v2417
    %v2419 = vlaneseq
    %v2420 = vshrl.u32 %v2419, 7
    %v2421 = vsub.s32 %v486, %v2420
    %v2422 = vrot.slane %v2223, %v2421
    %v2423 = vsel %vm491, %v2422, %v2418
    %v2424 = vlaneseq
    %v2425 = vshrl.u32 %v2424, 7
    %v2426 = vsub.s32 %v493, %v2425
    %v2427 = vrot.slane %v2226, %v2426
    %v2428 = vsel %vm498, %v2427, %v2423
    %v2429 = vlaneseq
    %v2430 = vshrl.u32 %v2429, 7
    %v2431 = vsub.s32 %v481, %v2430
    %v2432 = vrot.slane %v2229, %v2431
    %v2433 = vlaneseq
    %v2434 = vshrl.u32 %v2433, 7
    %v2435 = vsub.s32 %v486, %v2434
    %v2436 = vrot.slane %v2232, %v2435
    %v2437 = vsel %vm491, %v2436, %v2432
    %v2438 = vlaneseq
    %v2439 = vshrl.u32 %v2438, 7
    %v2440 = vsub.s32 %v493, %v2439
    %v2441 = vrot.slane %v2235, %v2440
    %v2442 = vsel %vm498, %v2441, %v2437
    %v2443 = vlaneseq
    %v2444 = vshrl.u32 %v2443, 7
    %v2445 = vsub.s32 %v481, %v2444
    %v2446 = vrot.slane %v2238, %v2445
    %v2447 = vlaneseq
    %v2448 = vshrl.u32 %v2447, 7
    %v2449 = vsub.s32 %v486, %v2448
    %v2450 = vrot.slane %v2241, %v2449
    %v2451 = vsel %vm491, %v2450, %v2446
    %v2452 = vlaneseq
    %v2453 = vshrl.u32 %v2452, 7
    %v2454 = vsub.s32 %v493, %v2453
    %v2455 = vrot.slane %v2244, %v2454
    %v2456 = vsel %vm498, %v2455, %v2451
    %v2457 = vlaneseq
    %v2458 = vshrl.u32 %v2457, 7
    %v2459 = vsub.s32 %v481, %v2458
    %v2460 = vrot.slane %v2247, %v2459
    %v2461 = vlaneseq
    %v2462 = vshrl.u32 %v2461, 7
    %v2463 = vsub.s32 %v486, %v2462
    %v2464 = vrot.slane %v2250, %v2463
    %v2465 = vsel %vm491, %v2464, %v2460
    %v2466 = vlaneseq
    %v2467 = vshrl.u32 %v2466, 7
    %v2468 = vsub.s32 %v493, %v2467
    %v2469 = vrot.slane %v2253, %v2468
    %v2470 = vsel %vm498, %v2469, %v2465
    %v2471 = vlaneseq
    %v2472 = vshrl.u32 %v2471, 7
    %v2473 = vsub.s32 %v481, %v2472
    %v2474 = vrot.slane %v2256, %v2473
    %v2475 = vlaneseq
    %v2476 = vshrl.u32 %v2475, 7
    %v2477 = vsub.s32 %v486, %v2476
    %v2478 = vrot.slane %v2259, %v2477
    %v2479 = vsel %vm491, %v2478, %v2474
    %v2480 = vlaneseq
    %v2481 = vshrl.u32 %v2480, 7
    %v2482 = vsub.s32 %v493, %v2481
    %v2483 = vrot.slane %v2262, %v2482
    %v2484 = vsel %vm498, %v2483, %v2479
    %v2485 = vlaneseq
    %v2486 = vshrl.u32 %v2485, 7
    %v2487 = vsub.s32 %v481, %v2486
    %v2488 = vrot.slane %v2265, %v2487
    %v2489 = vlaneseq
    %v2490 = vshrl.u32 %v2489, 7
    %v2491 = vsub.s32 %v486, %v2490
    %v2492 = vrot.slane %v2268, %v2491
    %v2493 = vsel %vm491, %v2492, %v2488
    %v2494 = vlaneseq
    %v2495 = vshrl.u32 %v2494, 7
    %v2496 = vsub.s32 %v493, %v2495
    %v2497 = vrot.slane %v2271, %v2496
    %v2498 = vsel %vm498, %v2497, %v2493
    %v2499 = vlaneseq
    %v2500 = vshrl.u32 %v2499, 7
    %v2501 = vsub.s32 %v481, %v2500
    %v2502 = vrot.slane %v2274, %v2501
    %v2503 = vlaneseq
    %v2504 = vshrl.u32 %v2503, 7
    %v2505 = vsub.s32 %v486, %v2504
    %v2506 = vrot.slane %v2277, %v2505
    %v2507 = vsel %vm491, %v2506, %v2502
    %v2508 = vlaneseq
    %v2509 = vshrl.u32 %v2508, 7
    %v2510 = vsub.s32 %v493, %v2509
    %v2511 = vrot.slane %v2280, %v2510
    %v2512 = vsel %vm498, %v2511, %v2507
    %v2513 = vlaneseq
    %v2514 = vshrl.u32 %v2513, 7
    %v2515 = vsub.s32 %v481, %v2514
    %v2516 = vrot.slane %v2283, %v2515
    %v2517 = vlaneseq
    %v2518 = vshrl.u32 %v2517, 7
    %v2519 = vsub.s32 %v486, %v2518
    %v2520 = vrot.slane %v2286, %v2519
    %v2521 = vsel %vm491, %v2520, %v2516
    %v2522 = vlaneseq
    %v2523 = vshrl.u32 %v2522, 7
    %v2524 = vsub.s32 %v493, %v2523
    %v2525 = vrot.slane %v2289, %v2524
    %v2526 = vsel %vm498, %v2525, %v2521
    %v2527 = vlaneseq
    %v2528 = vshrl.u32 %v2527, 7
    %v2529 = vsub.s32 %v481, %v2528
    %v2530 = vrot.slane %v2292, %v2529
    %v2531 = vlaneseq
    %v2532 = vshrl.u32 %v2531, 7
    %v2533 = vsub.s32 %v486, %v2532
    %v2534 = vrot.slane %v2295, %v2533
    %v2535 = vsel %vm491, %v2534, %v2530
    %v2536 = vlaneseq
    %v2537 = vshrl.u32 %v2536, 7
    %v2538 = vsub.s32 %v493, %v2537
    %v2539 = vrot.slane %v2298, %v2538
    %v2540 = vsel %vm498, %v2539, %v2535
    %v2541 = vlaneseq
    %v2542 = vshrl.u32 %v2541, 7
    %v2543 = vsub.s32 %v481, %v2542
    %v2544 = vrot.slane %v2301, %v2543
    %v2545 = vlaneseq
    %v2546 = vshrl.u32 %v2545, 7
    %v2547 = vsub.s32 %v486, %v2546
    %v2548 = vrot.slane %v2304, %v2547
    %v2549 = vsel %vm491, %v2548, %v2544
    %v2550 = vlaneseq
    %v2551 = vshrl.u32 %v2550, 7
    %v2552 = vsub.s32 %v493, %v2551
    %v2553 = vrot.slane %v2307, %v2552
    %v2554 = vsel %vm498, %v2553, %v2549
    %v2555 = vlaneseq
    %v2556 = vshrl.u32 %v2555, 7
    %v2557 = vsub.s32 %v481, %v2556
    %v2558 = vrot.slane %v2310, %v2557
    %v2559 = vlaneseq
    %v2560 = vshrl.u32 %v2559, 7
    %v2561 = vsub.s32 %v486, %v2560
    %v2562 = vrot.slane %v2313, %v2561
    %v2563 = vsel %vm491, %v2562, %v2558
    %v2564 = vlaneseq
    %v2565 = vshrl.u32 %v2564, 7
    %v2566 = vsub.s32 %v493, %v2565
    %v2567 = vrot.slane %v2316, %v2566
    %v2568 = vsel %vm498, %v2567, %v2563
    %v2569 = vlaneseq
    %v2570 = vshrl.u32 %v2569, 7
    %v2571 = vsub.s32 %v481, %v2570
    %v2572 = vrot.slane %v2319, %v2571
    %v2573 = vlaneseq
    %v2574 = vshrl.u32 %v2573, 7
    %v2575 = vsub.s32 %v486, %v2574
    %v2576 = vrot.slane %v2322, %v2575
    %v2577 = vsel %vm491, %v2576, %v2572
    %v2578 = vlaneseq
    %v2579 = vshrl.u32 %v2578, 7
    %v2580 = vsub.s32 %v493, %v2579
    %v2581 = vrot.slane %v2325, %v2580
    %v2582 = vsel %vm498, %v2581, %v2577
    %v2583 = vlaneseq
    %v2584 = vshrl.u32 %v2583, 7
    %v2585 = vsub.s32 %v481, %v2584
    %v2586 = vrot.slane %v2328, %v2585
    %v2587 = vlaneseq
    %v2588 = vshrl.u32 %v2587, 7
    %v2589 = vsub.s32 %v486, %v2588
    %v2590 = vrot.slane %v2331, %v2589
    %v2591 = vsel %vm491, %v2590, %v2586
    %v2592 = vlaneseq
    %v2593 = vshrl.u32 %v2592, 7
    %v2594 = vsub.s32 %v493, %v2593
    %v2595 = vrot.slane %v2334, %v2594
    %v2596 = vsel %vm498, %v2595, %v2591
    %v2597 = vlaneseq
    %v2598 = vshrl.u32 %v2597, 7
    %v2599 = vsub.s32 %v481, %v2598
    %v2600 = vrot.slane %v2337, %v2599
    %v2601 = vlaneseq
    %v2602 = vshrl.u32 %v2601, 7
    %v2603 = vsub.s32 %v486, %v2602
    %v2604 = vrot.slane %v2340, %v2603
    %v2605 = vsel %vm491, %v2604, %v2600
    %v2606 = vlaneseq
    %v2607 = vshrl.u32 %v2606, 7
    %v2608 = vsub.s32 %v493, %v2607
    %v2609 = vrot.slane %v2343, %v2608
    %v2610 = vsel %vm498, %v2609, %v2605
    %v2611 = vlaneseq
    %v2612 = vshrl.u32 %v2611, 7
    %v2613 = vsub.s32 %v481, %v2612
    %v2614 = vrot.slane %v2346, %v2613
    %v2615 = vlaneseq
    %v2616 = vshrl.u32 %v2615, 7
    %v2617 = vsub.s32 %v486, %v2616
    %v2618 = vrot.slane %v2349, %v2617
    %v2619 = vsel %vm491, %v2618, %v2614
    %v2620 = vlaneseq
    %v2621 = vshrl.u32 %v2620, 7
    %v2622 = vsub.s32 %v493, %v2621
    %v2623 = vrot.slane %v2352, %v2622
    %v2624 = vsel %vm498, %v2623, %v2619
    %v2625 = vsel %vm710, %v2428, %v2414
    %v2626 = vsel %vm712, %v2442, %v2625
    %v2627 = vsel %vm714, %v2456, %v2626
    %v2628 = vsel %vm716, %v2470, %v2627
    %v2629 = vsel %vm718, %v2484, %v2628
    %v2630 = vsel %vm720, %v2498, %v2629
    %v2631 = vsel %vm722, %v2512, %v2630
    %v2632 = vsel %vm710, %v2540, %v2526
    %v2633 = vsel %vm712, %v2554, %v2632
    %v2634 = vsel %vm714, %v2568, %v2633
    %v2635 = vsel %vm716, %v2582, %v2634
    %v2636 = vsel %vm718, %v2596, %v2635
    %v2637 = vsel %vm720, %v2610, %v2636
    %v2638 = vsel %vm722, %v2624, %v2637
    %v2641 = vsel %vm286, %v2631, 0.0
    %2642 = vadd.xlane.f32.xlu0 %v2641
    %v2643 = vpop.xlane.xlu0 %2642
    %v2644 = vsel %vm286, %v2638, 0.0
    %2645 = vadd.xlane.f32.xlu0 %v2644
    %v2646 = vpop.xlane.xlu0 %2645
    %v2649 = vlaneseq
    %v2650 = vshrl.u32 %v2649, 7
    %v2651 = vsub.s32 %v481, %v2650
    %v2652 = vrot.slane %v2643, %v2651
    %v2653 = vlaneseq
    %v2654 = vshrl.u32 %v2653, 7
    %v2655 = vsub.s32 %v481, %v2654
    %v2656 = vrot.slane %v2646, %v2655
    %v2657 = vsel %vm710, %v2656, %v2652
    %v2659 = vadd.f32 %v2023, %v2657
    %vm2660 = vcmask 58368
    %2661 = vst.msk [vmem:[#allocation8] sm:$0x3] %vm2660, %v2659
    %v2662 = vsel %vm2660, %v2659, -inf
    %2663 = vmax.xlane.f32.xlu0 %v2662
    %v2664 = vpop.xlane.xlu0 %2663
    %v2665 = vsub.f32 %v2659, %v2664
    %v2666 = vmul.f32 %v2665, 1.442695
    %v2667 = vpow.pop %v2666
    %v2668 = vsel %vm2660, %v2667, 0.0
    %2669 = vadd.xlane.f32.xlu0 %v2668
    %v2670 = vpop.xlane.xlu0 %2669
    %v2671 = vrcp.pop %v2670
    %v2672 = vmul.f32 %v2667, %v2671
    %2673 = vst.msk [vmem:[#allocation9] sm:$0x3] %vm2660, %v2672
    // Predicated region
    $region30: #{actor_conv_forward.1} parent=1 // pred_check
      _
    $region31: #{actor_conv_forward.1} parent=1 // pred_check_branch
      %2675 = sbr.rel (0) target = $region33
    $region32: #{actor_conv_forward.1} parent=1 // pred_region
      %s2677 = ssub.s32 32, 32
      %2678 = vsyncadd [#allocation4], %s2677
      %s2680 = sshll.u32 [#allocation8], 4
      %s2681 = int_to_ptr.vmem [resolvable:$true] %s2680
      %2683 = dma.vmem_to_hbm [thread:$0]  %s2681, 32, %s5, [#allocation4]
    $region33: #{actor_conv_forward.1} parent=1 // pred_fallthru
      _
    // Predicated region
    $region34: #{actor_conv_forward.1} parent=1 // pred_check
      _
    $region35: #{actor_conv_forward.1} parent=1 // pred_check_branch
      %2685 = sbr.rel (0) target = $region37
    $region36: #{actor_conv_forward.1} parent=1 // pred_region
      %s2687 = ssub.s32 32, 32
      %2688 = vsyncadd [#allocation10], %s2687
      %s2690 = sshll.u32 [#allocation9], 4
      %s2691 = int_to_ptr.vmem [resolvable:$true] %s2690
      %2693 = dma.vmem_to_hbm [thread:$0]  %s2691, 32, %s6, [#allocation10]
    $region37: #{actor_conv_forward.1} parent=1 // pred_fallthru
      _
    // Predicated region
    $region38: #{actor_conv_forward.1} parent=1 // pred_check
      _
    $region39: #{actor_conv_forward.1} parent=1 // pred_check_branch
      %2695 = sbr.rel (0) target = $region41
    $region40: #{actor_conv_forward.1} parent=1 // pred_region
      %2696 = dma.done [#allocation4], 32
    $region41: #{actor_conv_forward.1} parent=1 // pred_fallthru
      _
    // Predicated region
    $region42: #{actor_conv_forward.1} parent=1 // pred_check
      _
    $region43: #{actor_conv_forward.1} parent=1 // pred_check_branch
      %2698 = sbr.rel (0) target = $region45
    $region44: #{actor_conv_forward.1} parent=1 // pred_region
      %2699 = dma.done [#allocation10], 32
    $region45: #{actor_conv_forward.1} parent=1 // pred_fallthru
      _
    %2700 = vsyncpa [#allocation4], 1
    %2701 = vsyncpa [#allocation10], 1
    %2702 = vsyncpa [#allocation5], 1
    %2703 = vsyncpa [#allocation7], 1

</llo_original>
